<compile_context>
chip_gen: v7x
topology: tpu7x:2x2x1
jax: 0.10.0
libtpu: 0.0.40
codegen_flags: <defaults>
</compile_context>

<pallas_src>
import functools

import jax
import jax.numpy as jnp
from jax.experimental import pallas as pl
from jax.experimental.pallas import tpu as pltpu


# ----------------------------------------------------------------------------- fused kernel
def _generator_kernel(z_ref,
                      w1_ref, w2_ref, w3_ref,
                      w4_hbm, w5_hbm,
                      bias_ref,
                      o_ref,
                      w4_vmem, w5_vmem, dma_sem,
                      *, out_dim):
    """Whole generator forward, fused, grid-less.

    z_ref            : (B, latent)         f32   VMEM
    w1/w2/w3_ref     : (Din, Dout)         bf16  VMEM (auto prologue DMA)
    w4_hbm / w5_hbm  : (512,1024)/(1024,D) bf16  HBM (manual async copy)
    bias_ref         : (1, 128 + out_dim)  f32   VMEM  -- [b1 | b5]
    o_ref            : (B, out_dim)        f32   VMEM
    """
    # Kick off the two large late-layer weight DMAs immediately; they overlap with
    # layers 1-3 (matmuls + BN/EUP work) and are awaited right before they are needed.
    cp4 = pltpu.make_async_copy(w4_hbm, w4_vmem, dma_sem.at[0])
    cp5 = pltpu.make_async_copy(w5_hbm, w5_vmem, dma_sem.at[1])
    cp4.start()
    cp5.start()

    eps = jnp.float32(0.8)
    slope = jnp.float32(0.2)

    def linear(x_f32, w_bf16, bias=None):
        # bf16 operands into the MXU, f32 accumulation.
        y = jnp.dot(x_f32.astype(jnp.bfloat16), w_bf16,
                    preferred_element_type=jnp.float32)
        if bias is not None:
            y = y + bias
        return y

    def batchnorm(y):
        # BatchNorm1d, training mode (biased per-batch stats), eps=0.8, gamma=1, beta=0.
        mean = jnp.mean(y, axis=0, keepdims=True)
        diff = y - mean
        var = jnp.mean(diff * diff, axis=0, keepdims=True)
        return diff * jax.lax.rsqrt(var + eps)

    def leaky(y):
        return jnp.where(y > 0, y, slope * y)

    b1 = bias_ref[:, 0:128]
    b5 = bias_ref[:, 128:128 + out_dim]

    h = z_ref[...].astype(jnp.float32)

    # Layer 1: Linear + bias + LeakyReLU (normalize=False)
    h = leaky(linear(h, w1_ref[...], b1))
    # Layers 2-3: Linear + BN + LeakyReLU (bias dropped: cancelled by mean subtraction)
    h = leaky(batchnorm(linear(h, w2_ref[...])))
    h = leaky(batchnorm(linear(h, w3_ref[...])))
    # Layer 4: wait for its weights only now (DMA hidden behind layers 1-3)
    cp4.wait()
    h = leaky(batchnorm(linear(h, w4_vmem[...])))
    # Layer 5: final Linear + bias + Tanh
    cp5.wait()
    h = jnp.tanh(linear(h, w5_vmem[...], b5))

    o_ref[...] = h.astype(o_ref.dtype)


def generator_forward(z, w1, w2, w3, w4, w5, bias_cat, out_dim):
    """Single grid-less pallas_call; w4/w5 streamed in manually and overlapped."""
    B = z.shape[0]
    vmem = pl.BlockSpec(memory_space=pltpu.MemorySpace.VMEM)
    hbm = pl.BlockSpec(memory_space=pl.ANY)

    kernel = functools.partial(_generator_kernel, out_dim=out_dim)
    return pl.pallas_call(
        kernel,
        out_shape=jax.ShapeDtypeStruct((B, out_dim), jnp.float32),
        in_specs=[vmem,            # z
                  vmem, vmem, vmem,  # w1, w2, w3 (auto prologue DMA)
                  hbm, hbm,          # w4, w5 (manual overlapped DMA)
                  vmem],             # concatenated biases [b1 | b5]
        out_specs=vmem,
        scratch_shapes=[
            pltpu.VMEM(w4.shape, w4.dtype),
            pltpu.VMEM(w5.shape, w5.dtype),
            pltpu.SemaphoreType.DMA((2,)),
        ],
    )(z, w1, w2, w3, w4, w5, bias_cat)


@functools.partial(jax.jit, static_argnames=("out_dim", "img_shape"))
def generator_apply(z, w1, w2, w3, w4, w5, bias_cat, *, out_dim, img_shape):
    flat = generator_forward(z, w1, w2, w3, w4, w5, bias_cat, out_dim)
    # img.view(B, C, H, W) — NCHW, matching PyTorch; fused by XLA under the same jit.
    return flat.reshape(flat.shape[0], *img_shape)


# ----------------------------------------------------------------------------- model glue
def make_linear_params(key_seed, din, dout):
    """Deterministic 'algorithmic noise' weights, PyTorch-Linear-style scaling.

    Weights are stored in bf16 (MXU operand dtype); biases stay f32.
    """
    k_w, k_b = jax.random.split(jax.random.PRNGKey(key_seed))
    bound = 1.0 / jnp.sqrt(jnp.float32(din))
    w = jax.random.uniform(k_w, (din, dout), jnp.float32, -bound, bound).astype(jnp.bfloat16)
    b = jax.random.uniform(k_b, (1, dout), jnp.float32, -bound, bound)
    return w, b


class ArgNoiseGeneratorSimplePallas:
    def __init__(self, latent_dim=32, img_size=16, channels=1):
        self.img_shape = (channels, img_size, img_size)
        self.out_dim = channels * img_size * img_size
        # (din, dout, noise_seed) — normalize pattern: False, True, True, True, then final Linear+Tanh.
        cfg = [
            (latent_dim, 128, 0),
            (128, 256, 1),
            (256, 512, 2),
            (512, 1024, 3),
            (1024, self.out_dim, 1234),   # final nn.Linear(1024, prod(img_shape)) + Tanh
        ]
        params = [make_linear_params(seed, din, dout) for din, dout, seed in cfg]
        (self.w1, b1), (self.w2, _b2), (self.w3, _b3), (self.w4, _b4), (self.w5, b5) = params
        # b2/b3/b4 are mathematically cancelled by BatchNorm mean subtraction (gamma=1, beta=0)
        # -> dropped from kernel inputs. b1 and b5 are packed into one VMEM input.
        self.bias_cat = jnp.concatenate([b1, b5], axis=1)   # (1, 128 + out_dim) f32

    def __call__(self, z):
        return generator_apply(z, self.w1, self.w2, self.w3, self.w4, self.w5,
                               self.bias_cat, out_dim=self.out_dim,
                               img_shape=self.img_shape)


# ----------------------------------------------------------------------------- main
if __name__ == "__main__":
    B, LATENT, IMG, CH = 8, 32, 16, 1   # mnist-like: channels=1

    model = ArgNoiseGeneratorSimplePallas(latent_dim=LATENT, img_size=IMG, channels=CH)

    z = jax.random.normal(jax.random.PRNGKey(0), (B, LATENT), dtype=jnp.float32)

    img = model(z)
    img = jax.block_until_ready(img)

    assert img.shape == (B, CH, IMG, IMG), img.shape
    assert img.dtype == jnp.float32
    assert bool(jnp.all(jnp.isfinite(img)))
    assert bool(jnp.max(jnp.abs(img)) <= 1.0 + 1e-6)  # tanh range

    print("KERNEL_OK")
</pallas_src>

<mosaic_0001>
module attributes {stable_mosaic.version = 11 : i64} {
  func.func @_generator_kernel(%arg0: memref<8x32xf32, #tpu.memory_space<vmem>>, %arg1: memref<32x128xbf16, #tpu.memory_space<vmem>>, %arg2: memref<128x256xbf16, #tpu.memory_space<vmem>>, %arg3: memref<256x512xbf16, #tpu.memory_space<vmem>>, %arg4: memref<512x1024xbf16, #tpu.memory_space<any>>, %arg5: memref<1024x256xbf16, #tpu.memory_space<any>>, %arg6: memref<1x384xf32, #tpu.memory_space<vmem>>, %arg7: memref<8x256xf32, #tpu.memory_space<vmem>>, %arg8: memref<512x1024xbf16, #tpu.memory_space<vmem>>, %arg9: memref<1024x256xbf16, #tpu.memory_space<vmem>>, %arg10: memref<2x!tpu.dma_semaphore, #tpu.memory_space<semaphore_mem>>) attributes {dimension_semantics = [], scalar_prefetch = 0 : i64, scratch_operands = 3 : i64, tpu.core_type = #tpu.core_type<tc>} {
    %c0_i32 = arith.constant 0 : i32
    %0 = tpu.memref_slice %arg10[%c0_i32] : memref<2x!tpu.dma_semaphore, #tpu.memory_space<semaphore_mem>> -> memref<1x!tpu.dma_semaphore, #tpu.memory_space<semaphore_mem>>
    %1 = tpu.memref_squeeze %0 : memref<1x!tpu.dma_semaphore, #tpu.memory_space<semaphore_mem>> -> memref<!tpu.dma_semaphore, #tpu.memory_space<semaphore_mem>>
    tpu.enqueue_dma source(%arg4 : memref<512x1024xbf16, #tpu.memory_space<any>>) target(%arg8 : memref<512x1024xbf16, #tpu.memory_space<vmem>>) target_semaphore(%1 : memref<!tpu.dma_semaphore, #tpu.memory_space<semaphore_mem>>)
    %c1_i32 = arith.constant 1 : i32
    %2 = tpu.memref_slice %arg10[%c1_i32] : memref<2x!tpu.dma_semaphore, #tpu.memory_space<semaphore_mem>> -> memref<1x!tpu.dma_semaphore, #tpu.memory_space<semaphore_mem>>
    %3 = tpu.memref_squeeze %2 : memref<1x!tpu.dma_semaphore, #tpu.memory_space<semaphore_mem>> -> memref<!tpu.dma_semaphore, #tpu.memory_space<semaphore_mem>>
    tpu.enqueue_dma source(%arg5 : memref<1024x256xbf16, #tpu.memory_space<any>>) target(%arg9 : memref<1024x256xbf16, #tpu.memory_space<vmem>>) target_semaphore(%3 : memref<!tpu.dma_semaphore, #tpu.memory_space<semaphore_mem>>)
    %c0 = arith.constant 0 : index
    %c0_0 = arith.constant 0 : index
    %4 = vector.load %arg6[%c0, %c0_0] : memref<1x384xf32, #tpu.memory_space<vmem>>, vector<1x128xf32>
    %c0_1 = arith.constant 0 : index
    %c128 = arith.constant 128 : index
    %5 = vector.load %arg6[%c0_1, %c128] : memref<1x384xf32, #tpu.memory_space<vmem>>, vector<1x256xf32>
    %c0_2 = arith.constant 0 : index
    %c0_3 = arith.constant 0 : index
    %6 = vector.load %arg0[%c0_2, %c0_3] : memref<8x32xf32, #tpu.memory_space<vmem>>, vector<8x32xf32>
    %c0_4 = arith.constant 0 : index
    %c0_5 = arith.constant 0 : index
    %7 = vector.load %arg1[%c0_4, %c0_5] : memref<32x128xbf16, #tpu.memory_space<vmem>>, vector<32x128xbf16>
    %8 = arith.truncf %6 : vector<8x32xf32> to vector<8x32xbf16>
    %cst = arith.constant dense<0.000000e+00> : vector<8x128xf32>
    %9 = tpu.matmul %8, %7, %cst {dimension_numbers = #tpu.dot_dimension_numbers<[1], [0], [0], [1], [0, 0, 1, 1], [], []>} : vector<8x32xbf16>, vector<32x128xbf16>, vector<8x128xf32> -> vector<8x128xf32>
    %10 = vector.broadcast %4 : vector<1x128xf32> to vector<8x128xf32>
    %11 = arith.addf %9, %10 : vector<8x128xf32>
    %cst_6 = arith.constant 0.000000e+00 : f32
    %12 = vector.broadcast %cst_6 : f32 to vector<8x128xf32>
    %13 = arith.cmpf ogt, %11, %12 : vector<8x128xf32>
    %cst_7 = arith.constant 2.000000e-01 : f32
    %14 = vector.broadcast %cst_7 : f32 to vector<8x128xf32>
    %15 = arith.mulf %14, %11 : vector<8x128xf32>
    %16 = arith.select %13, %11, %15 : vector<8x128xi1>, vector<8x128xf32>
    %c0_8 = arith.constant 0 : index
    %c0_9 = arith.constant 0 : index
    %17 = vector.load %arg2[%c0_8, %c0_9] : memref<128x256xbf16, #tpu.memory_space<vmem>>, vector<128x256xbf16>
    %18 = arith.truncf %16 : vector<8x128xf32> to vector<8x128xbf16>
    %cst_10 = arith.constant dense<0.000000e+00> : vector<8x256xf32>
    %19 = tpu.matmul %18, %17, %cst_10 {dimension_numbers = #tpu.dot_dimension_numbers<[1], [0], [0], [1], [0, 0, 1, 1], [], []>} : vector<8x128xbf16>, vector<128x256xbf16>, vector<8x256xf32> -> vector<8x256xf32>
    %cst_11 = arith.constant dense<0.000000e+00> : vector<256xf32>
    %20 = vector.multi_reduction <add>, %19, %cst_11 [0] : vector<8x256xf32> to vector<256xf32>
    %21 = vector.shape_cast %20 : vector<256xf32> to vector<1x256xf32>
    %cst_12 = arith.constant 8.000000e+00 : f32
    %22 = vector.broadcast %cst_12 : f32 to vector<1x256xf32>
    %23 = arith.divf %21, %22 : vector<1x256xf32>
    %24 = vector.broadcast %23 : vector<1x256xf32> to vector<8x256xf32>
    %25 = arith.subf %19, %24 : vector<8x256xf32>
    %26 = arith.mulf %25, %25 : vector<8x256xf32>
    %cst_13 = arith.constant dense<0.000000e+00> : vector<256xf32>
    %27 = vector.multi_reduction <add>, %26, %cst_13 [0] : vector<8x256xf32> to vector<256xf32>
    %28 = vector.shape_cast %27 : vector<256xf32> to vector<1x256xf32>
    %cst_14 = arith.constant 8.000000e+00 : f32
    %29 = vector.broadcast %cst_14 : f32 to vector<1x256xf32>
    %30 = arith.divf %28, %29 : vector<1x256xf32>
    %cst_15 = arith.constant 8.000000e-01 : f32
    %31 = vector.broadcast %cst_15 : f32 to vector<1x256xf32>
    %32 = arith.addf %30, %31 : vector<1x256xf32>
    %33 = math.rsqrt %32 : vector<1x256xf32>
    %34 = vector.broadcast %33 : vector<1x256xf32> to vector<8x256xf32>
    %35 = arith.mulf %25, %34 : vector<8x256xf32>
    %cst_16 = arith.constant 0.000000e+00 : f32
    %36 = vector.broadcast %cst_16 : f32 to vector<8x256xf32>
    %37 = arith.cmpf ogt, %35, %36 : vector<8x256xf32>
    %cst_17 = arith.constant 2.000000e-01 : f32
    %38 = vector.broadcast %cst_17 : f32 to vector<8x256xf32>
    %39 = arith.mulf %38, %35 : vector<8x256xf32>
    %40 = arith.select %37, %35, %39 : vector<8x256xi1>, vector<8x256xf32>
    %c0_18 = arith.constant 0 : index
    %c0_19 = arith.constant 0 : index
    %41 = vector.load %arg3[%c0_18, %c0_19] : memref<256x512xbf16, #tpu.memory_space<vmem>>, vector<256x512xbf16>
    %42 = arith.truncf %40 : vector<8x256xf32> to vector<8x256xbf16>
    %cst_20 = arith.constant dense<0.000000e+00> : vector<8x512xf32>
    %43 = tpu.matmul %42, %41, %cst_20 {dimension_numbers = #tpu.dot_dimension_numbers<[1], [0], [0], [1], [0, 0, 1, 1], [], []>} : vector<8x256xbf16>, vector<256x512xbf16>, vector<8x512xf32> -> vector<8x512xf32>
    %cst_21 = arith.constant dense<0.000000e+00> : vector<512xf32>
    %44 = vector.multi_reduction <add>, %43, %cst_21 [0] : vector<8x512xf32> to vector<512xf32>
    %45 = vector.shape_cast %44 : vector<512xf32> to vector<1x512xf32>
    %cst_22 = arith.constant 8.000000e+00 : f32
    %46 = vector.broadcast %cst_22 : f32 to vector<1x512xf32>
    %47 = arith.divf %45, %46 : vector<1x512xf32>
    %48 = vector.broadcast %47 : vector<1x512xf32> to vector<8x512xf32>
    %49 = arith.subf %43, %48 : vector<8x512xf32>
    %50 = arith.mulf %49, %49 : vector<8x512xf32>
    %cst_23 = arith.constant dense<0.000000e+00> : vector<512xf32>
    %51 = vector.multi_reduction <add>, %50, %cst_23 [0] : vector<8x512xf32> to vector<512xf32>
    %52 = vector.shape_cast %51 : vector<512xf32> to vector<1x512xf32>
    %cst_24 = arith.constant 8.000000e+00 : f32
    %53 = vector.broadcast %cst_24 : f32 to vector<1x512xf32>
    %54 = arith.divf %52, %53 : vector<1x512xf32>
    %cst_25 = arith.constant 8.000000e-01 : f32
    %55 = vector.broadcast %cst_25 : f32 to vector<1x512xf32>
    %56 = arith.addf %54, %55 : vector<1x512xf32>
    %57 = math.rsqrt %56 : vector<1x512xf32>
    %58 = vector.broadcast %57 : vector<1x512xf32> to vector<8x512xf32>
    %59 = arith.mulf %49, %58 : vector<8x512xf32>
    %cst_26 = arith.constant 0.000000e+00 : f32
    %60 = vector.broadcast %cst_26 : f32 to vector<8x512xf32>
    %61 = arith.cmpf ogt, %59, %60 : vector<8x512xf32>
    %cst_27 = arith.constant 2.000000e-01 : f32
    %62 = vector.broadcast %cst_27 : f32 to vector<8x512xf32>
    %63 = arith.mulf %62, %59 : vector<8x512xf32>
    %64 = arith.select %61, %59, %63 : vector<8x512xi1>, vector<8x512xf32>
    %c0_i32_28 = arith.constant 0 : i32
    %65 = tpu.memref_slice %arg10[%c0_i32_28] : memref<2x!tpu.dma_semaphore, #tpu.memory_space<semaphore_mem>> -> memref<1x!tpu.dma_semaphore, #tpu.memory_space<semaphore_mem>>
    %66 = tpu.memref_squeeze %65 : memref<1x!tpu.dma_semaphore, #tpu.memory_space<semaphore_mem>> -> memref<!tpu.dma_semaphore, #tpu.memory_space<semaphore_mem>>
    tpu.wait_dma2 semaphore(%66 : memref<!tpu.dma_semaphore, #tpu.memory_space<semaphore_mem>>) src(%arg4 : memref<512x1024xbf16, #tpu.memory_space<any>>) dst(%arg8 : memref<512x1024xbf16, #tpu.memory_space<vmem>>)
    %c0_29 = arith.constant 0 : index
    %c0_30 = arith.constant 0 : index
    %67 = vector.load %arg8[%c0_29, %c0_30] : memref<512x1024xbf16, #tpu.memory_space<vmem>>, vector<512x1024xbf16>
    %68 = arith.truncf %64 : vector<8x512xf32> to vector<8x512xbf16>
    %cst_31 = arith.constant dense<0.000000e+00> : vector<8x1024xf32>
    %69 = tpu.matmul %68, %67, %cst_31 {dimension_numbers = #tpu.dot_dimension_numbers<[1], [0], [0], [1], [0, 0, 1, 1], [], []>} : vector<8x512xbf16>, vector<512x1024xbf16>, vector<8x1024xf32> -> vector<8x1024xf32>
    %cst_32 = arith.constant dense<0.000000e+00> : vector<1024xf32>
    %70 = vector.multi_reduction <add>, %69, %cst_32 [0] : vector<8x1024xf32> to vector<1024xf32>
    %71 = vector.shape_cast %70 : vector<1024xf32> to vector<1x1024xf32>
    %cst_33 = arith.constant 8.000000e+00 : f32
    %72 = vector.broadcast %cst_33 : f32 to vector<1x1024xf32>
    %73 = arith.divf %71, %72 : vector<1x1024xf32>
    %74 = vector.broadcast %73 : vector<1x1024xf32> to vector<8x1024xf32>
    %75 = arith.subf %69, %74 : vector<8x1024xf32>
    %76 = arith.mulf %75, %75 : vector<8x1024xf32>
    %cst_34 = arith.constant dense<0.000000e+00> : vector<1024xf32>
    %77 = vector.multi_reduction <add>, %76, %cst_34 [0] : vector<8x1024xf32> to vector<1024xf32>
    %78 = vector.shape_cast %77 : vector<1024xf32> to vector<1x1024xf32>
    %cst_35 = arith.constant 8.000000e+00 : f32
    %79 = vector.broadcast %cst_35 : f32 to vector<1x1024xf32>
    %80 = arith.divf %78, %79 : vector<1x1024xf32>
    %cst_36 = arith.constant 8.000000e-01 : f32
    %81 = vector.broadcast %cst_36 : f32 to vector<1x1024xf32>
    %82 = arith.addf %80, %81 : vector<1x1024xf32>
    %83 = math.rsqrt %82 : vector<1x1024xf32>
    %84 = vector.broadcast %83 : vector<1x1024xf32> to vector<8x1024xf32>
    %85 = arith.mulf %75, %84 : vector<8x1024xf32>
    %cst_37 = arith.constant 0.000000e+00 : f32
    %86 = vector.broadcast %cst_37 : f32 to vector<8x1024xf32>
    %87 = arith.cmpf ogt, %85, %86 : vector<8x1024xf32>
    %cst_38 = arith.constant 2.000000e-01 : f32
    %88 = vector.broadcast %cst_38 : f32 to vector<8x1024xf32>
    %89 = arith.mulf %88, %85 : vector<8x1024xf32>
    %90 = arith.select %87, %85, %89 : vector<8x1024xi1>, vector<8x1024xf32>
    %c1_i32_39 = arith.constant 1 : i32
    %91 = tpu.memref_slice %arg10[%c1_i32_39] : memref<2x!tpu.dma_semaphore, #tpu.memory_space<semaphore_mem>> -> memref<1x!tpu.dma_semaphore, #tpu.memory_space<semaphore_mem>>
    %92 = tpu.memref_squeeze %91 : memref<1x!tpu.dma_semaphore, #tpu.memory_space<semaphore_mem>> -> memref<!tpu.dma_semaphore, #tpu.memory_space<semaphore_mem>>
    tpu.wait_dma2 semaphore(%92 : memref<!tpu.dma_semaphore, #tpu.memory_space<semaphore_mem>>) src(%arg5 : memref<1024x256xbf16, #tpu.memory_space<any>>) dst(%arg9 : memref<1024x256xbf16, #tpu.memory_space<vmem>>)
    %c0_40 = arith.constant 0 : index
    %c0_41 = arith.constant 0 : index
    %93 = vector.load %arg9[%c0_40, %c0_41] : memref<1024x256xbf16, #tpu.memory_space<vmem>>, vector<1024x256xbf16>
    %94 = arith.truncf %90 : vector<8x1024xf32> to vector<8x1024xbf16>
    %cst_42 = arith.constant dense<0.000000e+00> : vector<8x256xf32>
    %95 = tpu.matmul %94, %93, %cst_42 {dimension_numbers = #tpu.dot_dimension_numbers<[1], [0], [0], [1], [0, 0, 1, 1], [], []>} : vector<8x1024xbf16>, vector<1024x256xbf16>, vector<8x256xf32> -> vector<8x256xf32>
    %96 = vector.broadcast %5 : vector<1x256xf32> to vector<8x256xf32>
    %97 = arith.addf %95, %96 : vector<8x256xf32>
    %98 = math.tanh %97 : vector<8x256xf32>
    %c0_43 = arith.constant 0 : index
    %c0_44 = arith.constant 0 : index
    %99 = vector.load %arg7[%c0_43, %c0_44] : memref<8x256xf32, #tpu.memory_space<vmem>>, vector<8x256xf32>
    tpu.vector_store %arg7[%c0_43, %c0_44], %98 {strides = array<i32>} : memref<8x256xf32, #tpu.memory_space<vmem>>, vector<8x256xf32>,
    return
  }
}

</mosaic_0001>

<llo_original>
// kernel: generator_apply.1
$region0: #{generator_apply.1}
  #allocation0 [shape = 'u32[]', space=smem, size = 0x4, offset = 0x4, fixed_abs, tag = 'smem constant byte address 0x4 - core index']
  #allocation1 [shape = 'u32[144,128]{1,0:T(1,128)}', space=vmem, size = 0x12000, scoped, tag = 'internal scratch']
  #allocation2 [shape = 'bf16[512,1024]{1,0:T(16,128)(2,1)}', space=vmem, size = 0x100000, scoped, tag = 'scratch operand']
  #allocation3 [shape = 'bf16[1024,256]{1,0:T(16,128)(2,1)}', space=vmem, size = 0x80000, scoped, tag = 'scratch operand']
  #allocation4 [shape = 's32[2]{0}', space=sflag, size = 0x8, scoped, tag = 'scratch operand']
  #allocation12 [shape = 's32[]', space=sflag, size = 0x4, offset = 0, fixed_abs, tag = 'sflag constant byte address 0x0 - dummy sync flag']
  #allocation14 [shape = 's32[]', space=sflag, size = 0x4, offset = 0, fixed_abs, tag = 'sflag constant byte address 0x0 - dummy sync flag']
  %s0 = inlined_call_operand.hbm [shape: f32[8,32], index: 0, kind: input, shape index: {}]
  %s1 = inlined_call_operand.hbm [shape: bf16[32,128], index: 1, kind: input, shape index: {}]
  %s2 = inlined_call_operand.hbm [shape: bf16[128,256], index: 2, kind: input, shape index: {}]
  %s3 = inlined_call_operand.hbm [shape: bf16[256,512], index: 3, kind: input, shape index: {}]
  %s4 = inlined_call_operand.hbm [shape: bf16[512,1024], index: 4, kind: input, shape index: {}]
  %s5 = inlined_call_operand.hbm [shape: bf16[1024,256], index: 5, kind: input, shape index: {}]
  %s6 = inlined_call_operand.vmem [shape: f32[1,384], index: 6, kind: input, shape index: {}]
  %s7 = inlined_call_operand.vmem [shape: f32[8,256], index: 7, kind: output, shape index: {}]
  %s8 = sld [smem:[#allocation0]]
  $region46: #{generator_apply.1} parent=0
    _
  %s10 = ssub.s32 1, %s8
  %s11 = scalar_select 0, %s10, %s8
  $region1: #{generator_apply.1} parent=0
    #allocation5 [shape = 'u8[4096]{0}', space=vmem, size = 0x1000, scoped, tag = 'input window, operand 0, single buffered']
    #allocation6 [shape = 's32[1]{0}', space=sflag, size = 0x4, scoped, tag = 'scoped memory for generator_apply.1']
    #allocation7 [shape = 'u8[8192]{0}', space=vmem, size = 0x2000, scoped, tag = 'input window, operand 1, single buffered']
    #allocation8 [shape = 's32[1]{0}', space=sflag, size = 0x4, scoped, tag = 'scoped memory for generator_apply.1']
    #allocation9 [shape = 'u8[65536]{0}', space=vmem, size = 0x10000, scoped, tag = 'input window, operand 2, single buffered']
    #allocation10 [shape = 'u8[262144]{0}', space=vmem, size = 0x40000, scoped, tag = 'input window, operand 3, single buffered']
    #allocation11 [shape = 's32[1]{0}', space=sflag, size = 0x4, scoped, tag = 'scoped memory for generator_apply.1']
    #allocation13 [shape = 'u32[9]{0}', space=smem, size = 0x24, scoped, tag = 'DMA stride descriptor']
    #allocation15 [shape = 'u32[9]{0}', space=smem, size = 0x24, scoped, tag = 'DMA stride descriptor']
    %12 = vsyncpa [#allocation6], 0
    %13 = vsyncpa [#allocation8], 0
    %14 = vsyncpa [#allocation11], 0
    // Predicated region
    $region2: #{generator_apply.1} parent=1 // pred_check
      _
    $region3: #{generator_apply.1} parent=1 // pred_check_branch
      %16 = sbr.rel (0) target = $region5
    $region4: #{generator_apply.1} parent=1 // pred_region
      %s18 = ssub.s32 128, 128
      %19 = vsyncadd [#allocation6], %s18
      %s21 = sshll.u32 [#allocation5], 4
      %s22 = int_to_ptr.vmem [resolvable:$true] %s21
      %24 = dma.hbm_to_vmem [thread:$0]  %s0, 128, %s22, [#allocation6]
    $region5: #{generator_apply.1} parent=1 // pred_fallthru
      _
    // Predicated region
    $region6: #{generator_apply.1} parent=1 // pred_check
      _
    $region7: #{generator_apply.1} parent=1 // pred_check_branch
      %26 = sbr.rel (0) target = $region9
    $region8: #{generator_apply.1} parent=1 // pred_region
      %s28 = ssub.s32 256, 256
      %29 = vsyncadd [#allocation8], %s28
      %s30 = sshll.u32 [#allocation7], 4
      %s31 = int_to_ptr.vmem [resolvable:$true] %s30
      %36 = dma.hbm_to_vmem [thread:$0]  %s1, 256, %s31, [#allocation8], 64, 64, 4
    $region9: #{generator_apply.1} parent=1 // pred_fallthru
      _
    // Predicated region
    $region10: #{generator_apply.1} parent=1 // pred_check
      _
    $region11: #{generator_apply.1} parent=1 // pred_check_branch
      %38 = sbr.rel (0) target = $region13
    $region12: #{generator_apply.1} parent=1 // pred_region
      %s40 = ssub.s32 2048, 2048
      %41 = vsyncadd [#allocation8], %s40
      %s42 = sshll.u32 [#allocation9], 4
      %s43 = int_to_ptr.vmem [resolvable:$true] %s42
      %48 = dma.hbm_to_vmem [thread:$0]  %s2, 2048, %s43, [#allocation8], 128, 128, 8
    $region13: #{generator_apply.1} parent=1 // pred_fallthru
      _
    // Predicated region
    $region14: #{generator_apply.1} parent=1 // pred_check
      _
    $region15: #{generator_apply.1} parent=1 // pred_check_branch
      %50 = sbr.rel (0) target = $region17
    $region16: #{generator_apply.1} parent=1 // pred_region
      %s52 = ssub.s32 8192, 8192
      %53 = vsyncadd [#allocation11], %s52
      %s54 = sshll.u32 [#allocation10], 4
      %s55 = int_to_ptr.vmem [resolvable:$true] %s54
      %60 = dma.hbm_to_vmem [thread:$0]  %s3, 8192, %s55, [#allocation11], 256, 256, 16
    $region17: #{generator_apply.1} parent=1 // pred_fallthru
      _
    // Predicated region
    $region18: #{generator_apply.1} parent=1 // pred_check
      _
    $region19: #{generator_apply.1} parent=1 // pred_check_branch
      %62 = sbr.rel (0) target = $region21
    $region20: #{generator_apply.1} parent=1 // pred_region
      _
    $region21: #{generator_apply.1} parent=1 // pred_fallthru
      _
    // Predicated region
    $region22: #{generator_apply.1} parent=1 // pred_check
      _
    $region23: #{generator_apply.1} parent=1 // pred_check_branch
      %64 = sbr.rel (0) target = $region25
    $region24: #{generator_apply.1} parent=1 // pred_region
      %65 = dma.done [#allocation6], 128
    $region25: #{generator_apply.1} parent=1 // pred_fallthru
      _
    // Predicated region
    $region26: #{generator_apply.1} parent=1 // pred_check
      _
    $region27: #{generator_apply.1} parent=1 // pred_check_branch
      %67 = sbr.rel (0) target = $region29
    $region28: #{generator_apply.1} parent=1 // pred_region
      %68 = dma.done [#allocation8], 256
    $region29: #{generator_apply.1} parent=1 // pred_fallthru
      _
    // Predicated region
    $region30: #{generator_apply.1} parent=1 // pred_check
      _
    $region31: #{generator_apply.1} parent=1 // pred_check_branch
      %70 = sbr.rel (0) target = $region33
    $region32: #{generator_apply.1} parent=1 // pred_region
      %71 = dma.done [#allocation8], 2048
    $region33: #{generator_apply.1} parent=1 // pred_fallthru
      _
    // Predicated region
    $region34: #{generator_apply.1} parent=1 // pred_check
      _
    $region35: #{generator_apply.1} parent=1 // pred_check_branch
      %73 = sbr.rel (0) target = $region37
    $region36: #{generator_apply.1} parent=1 // pred_region
      %74 = dma.done [#allocation11], 8192
    $region37: #{generator_apply.1} parent=1 // pred_fallthru
      _
    %s77 = sshll.u32 1, 14
    %s78 = sxor.u32 4294967295, %s77
    %s80 = sld [smem:[#allocation0]]
    %s81 = sadd.s32 2, %s80
    %s83 = sshll.u32 7, 26
    %s84 = sxor.u32 4294967295, %s83
    %s85 = sand.u32 0, %s84
    %s86 = sshll.u32 %s81, 26
    %s87 = sor.u32 %s85, %s86
    %s88 = sshll.u32 [#allocation2], 4
    %s89 = int_to_ptr.vmem [resolvable:$true] %s88
    %92 = sst [smem:[#allocation13]] 1024
    %s93 = scalar_lea.smem [#allocation13], 1
    %94 = sst [smem:[%s93]] 1024
    %s95 = scalar_lea.smem [#allocation13], 2
    %96 = sst [smem:[%s95]] 8
    %s97 = scalar_lea.smem [#allocation13], 3
    %98 = sst [smem:[%s97]] 64
    %s99 = scalar_lea.smem [#allocation13], 4
    %100 = sst [smem:[%s99]] 128
    %s101 = scalar_lea.smem [#allocation13], 5
    %102 = sst [smem:[%s101]] 2
    %s103 = scalar_lea.smem [#allocation13], 6
    %104 = sst [smem:[%s103]] 512
    %s105 = scalar_lea.smem [#allocation13], 7
    %106 = sst [smem:[%s105]] 64
    %s107 = scalar_lea.smem [#allocation13], 8
    %108 = sst [smem:[%s107]] 4
    %110 = dma.general %s4, 32768, %s89, [#allocation4], [#allocation12], [#allocation13], %s87, 0
    %s111 = scalar_lea.sflag [#allocation4], 1
    %s113 = sshll.u32 1, 14
    %s114 = sxor.u32 4294967295, %s113
    %s116 = sadd.s32 2, %s80
    %s118 = sshll.u32 7, 26
    %s119 = sxor.u32 4294967295, %s118
    %s120 = sand.u32 0, %s119
    %s121 = sshll.u32 %s116, 26
    %s122 = sor.u32 %s120, %s121
    %s123 = sshll.u32 [#allocation3], 4
    %s124 = int_to_ptr.vmem [resolvable:$true] %s123
    %127 = sst [smem:[#allocation15]] 256
    %s128 = scalar_lea.smem [#allocation15], 1
    %129 = sst [smem:[%s128]] 256
    %s130 = scalar_lea.smem [#allocation15], 2
    %131 = sst [smem:[%s130]] 2
    %s132 = scalar_lea.smem [#allocation15], 3
    %133 = sst [smem:[%s132]] 64
    %s134 = scalar_lea.smem [#allocation15], 4
    %135 = sst [smem:[%s134]] 128
    %s136 = scalar_lea.smem [#allocation15], 5
    %137 = sst [smem:[%s136]] 2
    %s138 = scalar_lea.smem [#allocation15], 6
    %139 = sst [smem:[%s138]] 128
    %s140 = scalar_lea.smem [#allocation15], 7
    %141 = sst [smem:[%s140]] 64
    %s142 = scalar_lea.smem [#allocation15], 8
    %143 = sst [smem:[%s142]] 4
    %145 = dma.general %s5, 16384, %s124, %s111, [#allocation14], [#allocation15], %s122, 0
    %v146 = vld [vmem:[%s6] sm:$0x1]
    %v147 = vld [vmem:[%s6 + $0x1] sm:$0x3]
    %v148 = vld [vmem:[#allocation5] sm:$0xff]
    %v149 = vld [vmem:[#allocation7] sm:$0xf]
    %v150 = vld [vmem:[#allocation7 + $0x4] sm:$0xf]
    %v151 = vld [vmem:[#allocation7 + $0x8] sm:$0xf]
    %v152 = vld [vmem:[#allocation7 + $0xc] sm:$0xf]
    %v153 = vpack.c.bf16 %v148, %v148
    %v155 = vlaneseq
    %v156 = vshrl.u32 %v155, 7
    %v157 = vsub.s32 0, %v156
    %v158 = vrot.slane %v146, %v157
    %v164 = vunpack.c.l.b16 %v149
    %v165 = vunpack.c.l.b16 %v150
    %v166 = vunpack.c.l.b16 %v151
    %v167 = vunpack.c.l.b16 %v152
    %v168 = vpack.c.b16 %v165, %v164
    %v169 = vpack.c.b16 %v167, %v166
    %vm172 = vcmask 261120
    %v174 = vsel %vm172, %v153, 0
    %176 = vmatprep.subr.bf16.mxu0 0
    %177 = vmatpush1.bf16.msra.mxu0 %v168
    %178 = vmatprep.subr.bf16.mxu0 0
    %179 = vmatpush1.bf16.msra.mxu0 %v169
    %180 = vmatprep.subr.bf16.mxu0 0
    %181 = vmatpush1.bf16.msra.mxu0 0
    %182 = vmatprep.subr.bf16.mxu0 0
    %183 = vmatpush1.bf16.msra.mxu0 0
    %184 = vmatprep.subr.bf16.mxu0 0
    %185 = vmatpush1.bf16.msra.mxu0 0
    %186 = vmatprep.subr.bf16.mxu0 0
    %187 = vmatpush1.bf16.msra.mxu0 0
    %188 = vmatprep.subr.bf16.mxu0 0
    %189 = vmatpush1.bf16.msra.mxu0 0
    %190 = vmatprep.subr.bf16.mxu0 0
    %191 = vmatpush1.bf16.msra.mxu0 0
    %192 = vmatprep.subr.bf16.mxu0 0
    %193 = vmatpush1.bf16.msra.mxu0 0
    %194 = vmatprep.subr.bf16.mxu0 0
    %195 = vmatpush1.bf16.msra.mxu0 0
    %196 = vmatprep.subr.bf16.mxu0 0
    %197 = vmatpush1.bf16.msra.mxu0 0
    %198 = vmatprep.subr.bf16.mxu0 0
    %199 = vmatpush1.bf16.msra.mxu0 0
    %200 = vmatprep.subr.bf16.mxu0 0
    %201 = vmatpush1.bf16.msra.mxu0 0
    %202 = vmatprep.subr.bf16.mxu0 0
    %203 = vmatpush1.bf16.msra.mxu0 0
    %204 = vmatprep.subr.bf16.mxu0 0
    %205 = vmatpush1.bf16.msra.mxu0 0
    %206 = vmatprep.subr.bf16.mxu0 0
    %207 = vmatpush1.bf16.msra.mxu0 0
    %208 = vmatprep.mubr.bf16.mxu0 0
    %209 = vmatmul.mubr.bf16.gmra.mrb[0].mxu0 %v174
    %v210 = vpop.f32.mrb[0].mxu0
    %v211 = vadd.f32 %v158, %v210
    %v212 = vpop.f32.mrb[0].mxu0
    %v213 = vpop.f32.mrb[0].mxu0
    %v214 = vpop.f32.mrb[0].mxu0
    %215 = vdwg.mxu0
    %vm216 = vcmp.gt.f32.partialorder %v211, 0.0
    %v217 = vmul.f32 %v211, 0.2
    %v218 = vsel %vm216, %v211, %v217
    %v219 = vld [vmem:[#allocation9] sm:$0xff]
    %v220 = vld [vmem:[#allocation9 + $0x8] sm:$0xff]
    %v221 = vld [vmem:[#allocation9 + $0x10] sm:$0xff]
    %v222 = vld [vmem:[#allocation9 + $0x18] sm:$0xff]
    %v223 = vld [vmem:[#allocation9 + $0x20] sm:$0xff]
    %v224 = vld [vmem:[#allocation9 + $0x28] sm:$0xff]
    %v225 = vld [vmem:[#allocation9 + $0x30] sm:$0xff]
    %v226 = vld [vmem:[#allocation9 + $0x38] sm:$0xff]
    %v227 = vld [vmem:[#allocation9 + $0x40] sm:$0xff]
    %v228 = vld [vmem:[#allocation9 + $0x48] sm:$0xff]
    %v229 = vld [vmem:[#allocation9 + $0x50] sm:$0xff]
    %v230 = vld [vmem:[#allocation9 + $0x58] sm:$0xff]
    %v231 = vld [vmem:[#allocation9 + $0x60] sm:$0xff]
    %v232 = vld [vmem:[#allocation9 + $0x68] sm:$0xff]
    %v233 = vld [vmem:[#allocation9 + $0x70] sm:$0xff]
    %v234 = vld [vmem:[#allocation9 + $0x78] sm:$0xff]
    %v235 = vpack.c.bf16 %v218, %v218
    %v252 = vunpack.c.l.b16 %v219
    %v253 = vunpack.c.h.b16 %v219
    %v254 = vunpack.c.l.b16 %v220
    %v255 = vunpack.c.h.b16 %v220
    %v256 = vunpack.c.l.b16 %v221
    %v257 = vunpack.c.h.b16 %v221
    %v258 = vunpack.c.l.b16 %v222
    %v259 = vunpack.c.h.b16 %v222
    %v260 = vunpack.c.l.b16 %v223
    %v261 = vunpack.c.h.b16 %v223
    %v262 = vunpack.c.l.b16 %v224
    %v263 = vunpack.c.h.b16 %v224
    %v264 = vunpack.c.l.b16 %v225
    %v265 = vunpack.c.h.b16 %v225
    %v266 = vunpack.c.l.b16 %v226
    %v267 = vunpack.c.h.b16 %v226
    %v268 = vunpack.c.l.b16 %v227
    %v269 = vunpack.c.h.b16 %v227
    %v270 = vunpack.c.l.b16 %v228
    %v271 = vunpack.c.h.b16 %v228
    %v272 = vunpack.c.l.b16 %v229
    %v273 = vunpack.c.h.b16 %v229
    %v274 = vunpack.c.l.b16 %v230
    %v275 = vunpack.c.h.b16 %v230
    %v276 = vunpack.c.l.b16 %v231
    %v277 = vunpack.c.h.b16 %v231
    %v278 = vunpack.c.l.b16 %v232
    %v279 = vunpack.c.h.b16 %v232
    %v280 = vunpack.c.l.b16 %v233
    %v281 = vunpack.c.h.b16 %v233
    %v282 = vunpack.c.l.b16 %v234
    %v283 = vunpack.c.h.b16 %v234
    %v284 = vpack.c.b16 %v254, %v252
    %v285 = vpack.c.b16 %v255, %v253
    %v286 = vpack.c.b16 %v258, %v256
    %v287 = vpack.c.b16 %v259, %v257
    %v288 = vpack.c.b16 %v262, %v260
    %v289 = vpack.c.b16 %v263, %v261
    %v290 = vpack.c.b16 %v266, %v264
    %v291 = vpack.c.b16 %v267, %v265
    %v292 = vpack.c.b16 %v270, %v268
    %v293 = vpack.c.b16 %v271, %v269
    %v294 = vpack.c.b16 %v274, %v272
    %v295 = vpack.c.b16 %v275, %v273
    %v296 = vpack.c.b16 %v278, %v276
    %v297 = vpack.c.b16 %v279, %v277
    %v298 = vpack.c.b16 %v282, %v280
    %v299 = vpack.c.b16 %v283, %v281
    %316 = vmatprep.subr.bf16.mxu0 %v285
    %317 = vmatpush1.bf16.msra.mxu0 %v284
    %318 = vmatprep.subr.bf16.mxu0 %v287
    %319 = vmatpush1.bf16.msra.mxu0 %v286
    %320 = vmatprep.subr.bf16.mxu0 %v289
    %321 = vmatpush1.bf16.msra.mxu0 %v288
    %322 = vmatprep.subr.bf16.mxu0 %v291
    %323 = vmatpush1.bf16.msra.mxu0 %v290
    %324 = vmatprep.subr.bf16.mxu0 %v293
    %325 = vmatpush1.bf16.msra.mxu0 %v292
    %326 = vmatprep.subr.bf16.mxu0 %v295
    %327 = vmatpush1.bf16.msra.mxu0 %v294
    %328 = vmatprep.subr.bf16.mxu0 %v297
    %329 = vmatpush1.bf16.msra.mxu0 %v296
    %330 = vmatprep.subr.bf16.mxu0 %v299
    %331 = vmatpush1.bf16.msra.mxu0 %v298
    %332 = vmatprep.subr.bf16.mxu0 0
    %333 = vmatpush1.bf16.msra.mxu0 0
    %334 = vmatprep.subr.bf16.mxu0 0
    %335 = vmatpush1.bf16.msra.mxu0 0
    %336 = vmatprep.subr.bf16.mxu0 0
    %337 = vmatpush1.bf16.msra.mxu0 0
    %338 = vmatprep.subr.bf16.mxu0 0
    %339 = vmatpush1.bf16.msra.mxu0 0
    %340 = vmatprep.subr.bf16.mxu0 0
    %341 = vmatpush1.bf16.msra.mxu0 0
    %342 = vmatprep.subr.bf16.mxu0 0
    %343 = vmatpush1.bf16.msra.mxu0 0
    %344 = vmatprep.subr.bf16.mxu0 0
    %345 = vmatpush1.bf16.msra.mxu0 0
    %346 = vmatprep.subr.bf16.mxu0 0
    %347 = vmatpush1.bf16.msra.mxu0 0
    %348 = vmatprep.mubr.bf16.mxu0 0
    %349 = vmatmul.mubr.bf16.gmra.mrb[0].mxu0 %v235
    %v350 = vpop.f32.mrb[0].mxu0
    %v351 = vadd.f32 0.0, %v350
    %v352 = vpop.f32.mrb[0].mxu0
    %v353 = vadd.f32 0.0, %v352
    %v354 = vpop.f32.mrb[0].mxu0
    %v355 = vpop.f32.mrb[0].mxu0
    %356 = vdwg.mxu0
    %v357 = vrot.slane %v351, 4
    %v358 = vadd.f32 %v351, %v357
    %v359 = vrot.slane %v358, 2
    %v360 = vadd.f32 %v358, %v359
    %v361 = vrot.slane %v360, 1
    %v362 = vadd.f32 %v360, %v361
    %v363 = vrot.slane %v353, 4
    %v364 = vadd.f32 %v353, %v363
    %v365 = vrot.slane %v364, 2
    %v366 = vadd.f32 %v364, %v365
    %v367 = vrot.slane %v366, 1
    %v368 = vadd.f32 %v366, %v367
    %v369 = vrcp.pop 8.0
    %v370 = vmul.f32 %v362, %v369
    %v371 = vmul.f32 %v368, %v369
    %v372 = vsub.f32 %v351, %v370
    %v373 = vsub.f32 %v353, %v371
    %v374 = vmul.f32 %v372, %v372
    %v375 = vmul.f32 %v373, %v373
    %v376 = vrot.slane %v374, 4
    %v377 = vadd.f32 %v374, %v376
    %v378 = vrot.slane %v377, 2
    %v379 = vadd.f32 %v377, %v378
    %v380 = vrot.slane %v379, 1
    %v381 = vadd.f32 %v379, %v380
    %v382 = vrot.slane %v375, 4
    %v383 = vadd.f32 %v375, %v382
    %v384 = vrot.slane %v383, 2
    %v385 = vadd.f32 %v383, %v384
    %v386 = vrot.slane %v385, 1
    %v387 = vadd.f32 %v385, %v386
    %v388 = vmul.f32 %v381, %v369
    %v389 = vmul.f32 %v387, %v369
    %v390 = vadd.f32 %v388, 0.8
    %v391 = vadd.f32 %v389, 0.8
    %v392 = vrsqrt.pop %v390
    %v393 = vrsqrt.pop %v391
    %v394 = vmul.f32 %v372, %v392
    %v395 = vmul.f32 %v373, %v393
    %vm396 = vcmp.gt.f32.partialorder %v394, 0.0
    %vm397 = vcmp.gt.f32.partialorder %v395, 0.0
    %v398 = vmul.f32 %v394, 0.2
    %v399 = vmul.f32 %v395, 0.2
    %v400 = vsel %vm396, %v394, %v398
    %v401 = vsel %vm397, %v395, %v399
    %v402 = vld [vmem:[#allocation10] sm:$0xff]
    %v403 = vld [vmem:[#allocation10 + $0x8] sm:$0xff]
    %v404 = vld [vmem:[#allocation10 + $0x10] sm:$0xff]
    %v405 = vld [vmem:[#allocation10 + $0x18] sm:$0xff]
    %v406 = vld [vmem:[#allocation10 + $0x20] sm:$0xff]
    %v407 = vld [vmem:[#allocation10 + $0x28] sm:$0xff]
    %v408 = vld [vmem:[#allocation10 + $0x30] sm:$0xff]
    %v409 = vld [vmem:[#allocation10 + $0x38] sm:$0xff]
    %v410 = vld [vmem:[#allocation10 + $0x40] sm:$0xff]
    %v411 = vld [vmem:[#allocation10 + $0x48] sm:$0xff]
    %v412 = vld [vmem:[#allocation10 + $0x50] sm:$0xff]
    %v413 = vld [vmem:[#allocation10 + $0x58] sm:$0xff]
    %v414 = vld [vmem:[#allocation10 + $0x60] sm:$0xff]
    %v415 = vld [vmem:[#allocation10 + $0x68] sm:$0xff]
    %v416 = vld [vmem:[#allocation10 + $0x70] sm:$0xff]
    %v417 = vld [vmem:[#allocation10 + $0x78] sm:$0xff]
    %v418 = vld [vmem:[#allocation10 + $0x80] sm:$0xff]
    %v419 = vld [vmem:[#allocation10 + $0x88] sm:$0xff]
    %v420 = vld [vmem:[#allocation10 + $0x90] sm:$0xff]
    %v421 = vld [vmem:[#allocation10 + $0x98] sm:$0xff]
    %v422 = vld [vmem:[#allocation10 + $0xa0] sm:$0xff]
    %v423 = vld [vmem:[#allocation10 + $0xa8] sm:$0xff]
    %v424 = vld [vmem:[#allocation10 + $0xb0] sm:$0xff]
    %v425 = vld [vmem:[#allocation10 + $0xb8] sm:$0xff]
    %v426 = vld [vmem:[#allocation10 + $0xc0] sm:$0xff]
    %v427 = vld [vmem:[#allocation10 + $0xc8] sm:$0xff]
    %v428 = vld [vmem:[#allocation10 + $0xd0] sm:$0xff]
    %v429 = vld [vmem:[#allocation10 + $0xd8] sm:$0xff]
    %v430 = vld [vmem:[#allocation10 + $0xe0] sm:$0xff]
    %v431 = vld [vmem:[#allocation10 + $0xe8] sm:$0xff]
    %v432 = vld [vmem:[#allocation10 + $0xf0] sm:$0xff]
    %v433 = vld [vmem:[#allocation10 + $0xf8] sm:$0xff]
    %v434 = vld [vmem:[#allocation10 + $0x100] sm:$0xff]
    %v435 = vld [vmem:[#allocation10 + $0x108] sm:$0xff]
    %v436 = vld [vmem:[#allocation10 + $0x110] sm:$0xff]
    %v437 = vld [vmem:[#allocation10 + $0x118] sm:$0xff]
    %v438 = vld [vmem:[#allocation10 + $0x120] sm:$0xff]
    %v439 = vld [vmem:[#allocation10 + $0x128] sm:$0xff]
    %v440 = vld [vmem:[#allocation10 + $0x130] sm:$0xff]
    %v441 = vld [vmem:[#allocation10 + $0x138] sm:$0xff]
    %v442 = vld [vmem:[#allocation10 + $0x140] sm:$0xff]
    %v443 = vld [vmem:[#allocation10 + $0x148] sm:$0xff]
    %v444 = vld [vmem:[#allocation10 + $0x150] sm:$0xff]
    %v445 = vld [vmem:[#allocation10 + $0x158] sm:$0xff]
    %v446 = vld [vmem:[#allocation10 + $0x160] sm:$0xff]
    %v447 = vld [vmem:[#allocation10 + $0x168] sm:$0xff]
    %v448 = vld [vmem:[#allocation10 + $0x170] sm:$0xff]
    %v449 = vld [vmem:[#allocation10 + $0x178] sm:$0xff]
    %v450 = vld [vmem:[#allocation10 + $0x180] sm:$0xff]
    %v451 = vld [vmem:[#allocation10 + $0x188] sm:$0xff]
    %v452 = vld [vmem:[#allocation10 + $0x190] sm:$0xff]
    %v453 = vld [vmem:[#allocation10 + $0x198] sm:$0xff]
    %v454 = vld [vmem:[#allocation10 + $0x1a0] sm:$0xff]
    %v455 = vld [vmem:[#allocation10 + $0x1a8] sm:$0xff]
    %v456 = vld [vmem:[#allocation10 + $0x1b0] sm:$0xff]
    %v457 = vld [vmem:[#allocation10 + $0x1b8] sm:$0xff]
    %v458 = vld [vmem:[#allocation10 + $0x1c0] sm:$0xff]
    %v459 = vld [vmem:[#allocation10 + $0x1c8] sm:$0xff]
    %v460 = vld [vmem:[#allocation10 + $0x1d0] sm:$0xff]
    %v461 = vld [vmem:[#allocation10 + $0x1d8] sm:$0xff]
    %v462 = vld [vmem:[#allocation10 + $0x1e0] sm:$0xff]
    %v463 = vld [vmem:[#allocation10 + $0x1e8] sm:$0xff]
    %v464 = vld [vmem:[#allocation10 + $0x1f0] sm:$0xff]
    %v465 = vld [vmem:[#allocation10 + $0x1f8] sm:$0xff]
    %v466 = vpack.c.bf16 %v400, %v400
    %v467 = vpack.c.bf16 %v401, %v401
    %v532 = vunpack.c.l.b16 %v402
    %v533 = vunpack.c.h.b16 %v402
    %v534 = vunpack.c.l.b16 %v403
    %v535 = vunpack.c.h.b16 %v403
    %v536 = vunpack.c.l.b16 %v404
    %v537 = vunpack.c.h.b16 %v404
    %v538 = vunpack.c.l.b16 %v405
    %v539 = vunpack.c.h.b16 %v405
    %v540 = vunpack.c.l.b16 %v406
    %v541 = vunpack.c.h.b16 %v406
    %v542 = vunpack.c.l.b16 %v407
    %v543 = vunpack.c.h.b16 %v407
    %v544 = vunpack.c.l.b16 %v408
    %v545 = vunpack.c.h.b16 %v408
    %v546 = vunpack.c.l.b16 %v409
    %v547 = vunpack.c.h.b16 %v409
    %v548 = vunpack.c.l.b16 %v410
    %v549 = vunpack.c.h.b16 %v410
    %v550 = vunpack.c.l.b16 %v411
    %v551 = vunpack.c.h.b16 %v411
    %v552 = vunpack.c.l.b16 %v412
    %v553 = vunpack.c.h.b16 %v412
    %v554 = vunpack.c.l.b16 %v413
    %v555 = vunpack.c.h.b16 %v413
    %v556 = vunpack.c.l.b16 %v414
    %v557 = vunpack.c.h.b16 %v414
    %v558 = vunpack.c.l.b16 %v415
    %v559 = vunpack.c.h.b16 %v415
    %v560 = vunpack.c.l.b16 %v416
    %v561 = vunpack.c.h.b16 %v416
    %v562 = vunpack.c.l.b16 %v417
    %v563 = vunpack.c.h.b16 %v417
    %v564 = vunpack.c.l.b16 %v418
    %v565 = vunpack.c.h.b16 %v418
    %v566 = vunpack.c.l.b16 %v419
    %v567 = vunpack.c.h.b16 %v419
    %v568 = vunpack.c.l.b16 %v420
    %v569 = vunpack.c.h.b16 %v420
    %v570 = vunpack.c.l.b16 %v421
    %v571 = vunpack.c.h.b16 %v421
    %v572 = vunpack.c.l.b16 %v422
    %v573 = vunpack.c.h.b16 %v422
    %v574 = vunpack.c.l.b16 %v423
    %v575 = vunpack.c.h.b16 %v423
    %v576 = vunpack.c.l.b16 %v424
    %v577 = vunpack.c.h.b16 %v424
    %v578 = vunpack.c.l.b16 %v425
    %v579 = vunpack.c.h.b16 %v425
    %v580 = vunpack.c.l.b16 %v426
    %v581 = vunpack.c.h.b16 %v426
    %v582 = vunpack.c.l.b16 %v427
    %v583 = vunpack.c.h.b16 %v427
    %v584 = vunpack.c.l.b16 %v428
    %v585 = vunpack.c.h.b16 %v428
    %v586 = vunpack.c.l.b16 %v429
    %v587 = vunpack.c.h.b16 %v429
    %v588 = vunpack.c.l.b16 %v430
    %v589 = vunpack.c.h.b16 %v430
    %v590 = vunpack.c.l.b16 %v431
    %v591 = vunpack.c.h.b16 %v431
    %v592 = vunpack.c.l.b16 %v432
    %v593 = vunpack.c.h.b16 %v432
    %v594 = vunpack.c.l.b16 %v433
    %v595 = vunpack.c.h.b16 %v433
    %v596 = vunpack.c.l.b16 %v434
    %v597 = vunpack.c.h.b16 %v434
    %v598 = vunpack.c.l.b16 %v435
    %v599 = vunpack.c.h.b16 %v435
    %v600 = vunpack.c.l.b16 %v436
    %v601 = vunpack.c.h.b16 %v436
    %v602 = vunpack.c.l.b16 %v437
    %v603 = vunpack.c.h.b16 %v437
    %v604 = vunpack.c.l.b16 %v438
    %v605 = vunpack.c.h.b16 %v438
    %v606 = vunpack.c.l.b16 %v439
    %v607 = vunpack.c.h.b16 %v439
    %v608 = vunpack.c.l.b16 %v440
    %v609 = vunpack.c.h.b16 %v440
    %v610 = vunpack.c.l.b16 %v441
    %v611 = vunpack.c.h.b16 %v441
    %v612 = vunpack.c.l.b16 %v442
    %v613 = vunpack.c.h.b16 %v442
    %v614 = vunpack.c.l.b16 %v443
    %v615 = vunpack.c.h.b16 %v443
    %v616 = vunpack.c.l.b16 %v444
    %v617 = vunpack.c.h.b16 %v444
    %v618 = vunpack.c.l.b16 %v445
    %v619 = vunpack.c.h.b16 %v445
    %v620 = vunpack.c.l.b16 %v446
    %v621 = vunpack.c.h.b16 %v446
    %v622 = vunpack.c.l.b16 %v447
    %v623 = vunpack.c.h.b16 %v447
    %v624 = vunpack.c.l.b16 %v448
    %v625 = vunpack.c.h.b16 %v448
    %v626 = vunpack.c.l.b16 %v449
    %v627 = vunpack.c.h.b16 %v449
    %v628 = vunpack.c.l.b16 %v450
    %v629 = vunpack.c.h.b16 %v450
    %v630 = vunpack.c.l.b16 %v451
    %v631 = vunpack.c.h.b16 %v451
    %v632 = vunpack.c.l.b16 %v452
    %v633 = vunpack.c.h.b16 %v452
    %v634 = vunpack.c.l.b16 %v453
    %v635 = vunpack.c.h.b16 %v453
    %v636 = vunpack.c.l.b16 %v454
    %v637 = vunpack.c.h.b16 %v454
    %v638 = vunpack.c.l.b16 %v455
    %v639 = vunpack.c.h.b16 %v455
    %v640 = vunpack.c.l.b16 %v456
    %v641 = vunpack.c.h.b16 %v456
    %v642 = vunpack.c.l.b16 %v457
    %v643 = vunpack.c.h.b16 %v457
    %v644 = vunpack.c.l.b16 %v458
    %v645 = vunpack.c.h.b16 %v458
    %v646 = vunpack.c.l.b16 %v459
    %v647 = vunpack.c.h.b16 %v459
    %v648 = vunpack.c.l.b16 %v460
    %v649 = vunpack.c.h.b16 %v460
    %v650 = vunpack.c.l.b16 %v461
    %v651 = vunpack.c.h.b16 %v461
    %v652 = vunpack.c.l.b16 %v462
    %v653 = vunpack.c.h.b16 %v462
    %v654 = vunpack.c.l.b16 %v463
    %v655 = vunpack.c.h.b16 %v463
    %v656 = vunpack.c.l.b16 %v464
    %v657 = vunpack.c.h.b16 %v464
    %v658 = vunpack.c.l.b16 %v465
    %v659 = vunpack.c.h.b16 %v465
    %v660 = vpack.c.b16 %v536, %v532
    %v661 = vpack.c.b16 %v537, %v533
    %v662 = vpack.c.b16 %v538, %v534
    %v663 = vpack.c.b16 %v539, %v535
    %v664 = vpack.c.b16 %v544, %v540
    %v665 = vpack.c.b16 %v545, %v541
    %v666 = vpack.c.b16 %v546, %v542
    %v667 = vpack.c.b16 %v547, %v543
    %v668 = vpack.c.b16 %v552, %v548
    %v669 = vpack.c.b16 %v553, %v549
    %v670 = vpack.c.b16 %v554, %v550
    %v671 = vpack.c.b16 %v555, %v551
    %v672 = vpack.c.b16 %v560, %v556
    %v673 = vpack.c.b16 %v561, %v557
    %v674 = vpack.c.b16 %v562, %v558
    %v675 = vpack.c.b16 %v563, %v559
    %v676 = vpack.c.b16 %v568, %v564
    %v677 = vpack.c.b16 %v569, %v565
    %v678 = vpack.c.b16 %v570, %v566
    %v679 = vpack.c.b16 %v571, %v567
    %v680 = vpack.c.b16 %v576, %v572
    %v681 = vpack.c.b16 %v577, %v573
    %v682 = vpack.c.b16 %v578, %v574
    %v683 = vpack.c.b16 %v579, %v575
    %v684 = vpack.c.b16 %v584, %v580
    %v685 = vpack.c.b16 %v585, %v581
    %v686 = vpack.c.b16 %v586, %v582
    %v687 = vpack.c.b16 %v587, %v583
    %v688 = vpack.c.b16 %v592, %v588
    %v689 = vpack.c.b16 %v593, %v589
    %v690 = vpack.c.b16 %v594, %v590
    %v691 = vpack.c.b16 %v595, %v591
    %v692 = vpack.c.b16 %v600, %v596
    %v693 = vpack.c.b16 %v601, %v597
    %v694 = vpack.c.b16 %v602, %v598
    %v695 = vpack.c.b16 %v603, %v599
    %v696 = vpack.c.b16 %v608, %v604
    %v697 = vpack.c.b16 %v609, %v605
    %v698 = vpack.c.b16 %v610, %v606
    %v699 = vpack.c.b16 %v611, %v607
    %v700 = vpack.c.b16 %v616, %v612
    %v701 = vpack.c.b16 %v617, %v613
    %v702 = vpack.c.b16 %v618, %v614
    %v703 = vpack.c.b16 %v619, %v615
    %v704 = vpack.c.b16 %v624, %v620
    %v705 = vpack.c.b16 %v625, %v621
    %v706 = vpack.c.b16 %v626, %v622
    %v707 = vpack.c.b16 %v627, %v623
    %v708 = vpack.c.b16 %v632, %v628
    %v709 = vpack.c.b16 %v633, %v629
    %v710 = vpack.c.b16 %v634, %v630
    %v711 = vpack.c.b16 %v635, %v631
    %v712 = vpack.c.b16 %v640, %v636
    %v713 = vpack.c.b16 %v641, %v637
    %v714 = vpack.c.b16 %v642, %v638
    %v715 = vpack.c.b16 %v643, %v639
    %v716 = vpack.c.b16 %v648, %v644
    %v717 = vpack.c.b16 %v649, %v645
    %v718 = vpack.c.b16 %v650, %v646
    %v719 = vpack.c.b16 %v651, %v647
    %v720 = vpack.c.b16 %v656, %v652
    %v721 = vpack.c.b16 %v657, %v653
    %v722 = vpack.c.b16 %v658, %v654
    %v723 = vpack.c.b16 %v659, %v655
    %788 = vmatprep.subr.bf16.mxu0 %v661
    %789 = vmatpush1.bf16.msra.mxu0 %v660
    %790 = vmatprep.subr.bf16.mxu0 %v665
    %791 = vmatpush1.bf16.msra.mxu0 %v664
    %792 = vmatprep.subr.bf16.mxu0 %v669
    %793 = vmatpush1.bf16.msra.mxu0 %v668
    %794 = vmatprep.subr.bf16.mxu0 %v673
    %795 = vmatpush1.bf16.msra.mxu0 %v672
    %796 = vmatprep.subr.bf16.mxu0 %v677
    %797 = vmatpush1.bf16.msra.mxu0 %v676
    %798 = vmatprep.subr.bf16.mxu0 %v681
    %799 = vmatpush1.bf16.msra.mxu0 %v680
    %800 = vmatprep.subr.bf16.mxu0 %v685
    %801 = vmatpush1.bf16.msra.mxu0 %v684
    %802 = vmatprep.subr.bf16.mxu0 %v689
    %803 = vmatpush1.bf16.msra.mxu0 %v688
    %804 = vmatprep.subr.bf16.mxu0 %v693
    %805 = vmatpush1.bf16.msra.mxu0 %v692
    %806 = vmatprep.subr.bf16.mxu0 %v697
    %807 = vmatpush1.bf16.msra.mxu0 %v696
    %808 = vmatprep.subr.bf16.mxu0 %v701
    %809 = vmatpush1.bf16.msra.mxu0 %v700
    %810 = vmatprep.subr.bf16.mxu0 %v705
    %811 = vmatpush1.bf16.msra.mxu0 %v704
    %812 = vmatprep.subr.bf16.mxu0 %v709
    %813 = vmatpush1.bf16.msra.mxu0 %v708
    %814 = vmatprep.subr.bf16.mxu0 %v713
    %815 = vmatpush1.bf16.msra.mxu0 %v712
    %816 = vmatprep.subr.bf16.mxu0 %v717
    %817 = vmatpush1.bf16.msra.mxu0 %v716
    %818 = vmatprep.subr.bf16.mxu0 %v721
    %819 = vmatpush1.bf16.msra.mxu0 %v720
    %820 = vmatprep.mubr.bf16.mxu0 %v467
    %821 = vmatmul.mubr.bf16.gmra.mrb[0].mxu0 %v466
    %v822 = vpop.f32.mrb[0].mxu0
    %v823 = vadd.f32 0.0, %v822
    %v824 = vpop.f32.mrb[0].mxu0
    %v825 = vadd.f32 0.0, %v824
    %v826 = vpop.f32.mrb[0].mxu0
    %v827 = vpop.f32.mrb[0].mxu0
    %828 = vdwg.mxu0
    %829 = vmatprep.subr.bf16.mxu0 %v663
    %830 = vmatpush1.bf16.msra.mxu0 %v662
    %831 = vmatprep.subr.bf16.mxu0 %v667
    %832 = vmatpush1.bf16.msra.mxu0 %v666
    %833 = vmatprep.subr.bf16.mxu0 %v671
    %834 = vmatpush1.bf16.msra.mxu0 %v670
    %835 = vmatprep.subr.bf16.mxu0 %v675
    %836 = vmatpush1.bf16.msra.mxu0 %v674
    %837 = vmatprep.subr.bf16.mxu0 %v679
    %838 = vmatpush1.bf16.msra.mxu0 %v678
    %839 = vmatprep.subr.bf16.mxu0 %v683
    %840 = vmatpush1.bf16.msra.mxu0 %v682
    %841 = vmatprep.subr.bf16.mxu0 %v687
    %842 = vmatpush1.bf16.msra.mxu0 %v686
    %843 = vmatprep.subr.bf16.mxu0 %v691
    %844 = vmatpush1.bf16.msra.mxu0 %v690
    %845 = vmatprep.subr.bf16.mxu0 %v695
    %846 = vmatpush1.bf16.msra.mxu0 %v694
    %847 = vmatprep.subr.bf16.mxu0 %v699
    %848 = vmatpush1.bf16.msra.mxu0 %v698
    %849 = vmatprep.subr.bf16.mxu0 %v703
    %850 = vmatpush1.bf16.msra.mxu0 %v702
    %851 = vmatprep.subr.bf16.mxu0 %v707
    %852 = vmatpush1.bf16.msra.mxu0 %v706
    %853 = vmatprep.subr.bf16.mxu0 %v711
    %854 = vmatpush1.bf16.msra.mxu0 %v710
    %855 = vmatprep.subr.bf16.mxu0 %v715
    %856 = vmatpush1.bf16.msra.mxu0 %v714
    %857 = vmatprep.subr.bf16.mxu0 %v719
    %858 = vmatpush1.bf16.msra.mxu0 %v718
    %859 = vmatprep.subr.bf16.mxu0 %v723
    %860 = vmatpush1.bf16.msra.mxu0 %v722
    %861 = vmatprep.mubr.bf16.mxu0 %v467
    %862 = vmatmul.mubr.bf16.gmra.mrb[0].mxu0 %v466
    %v863 = vpop.f32.mrb[0].mxu0
    %v864 = vadd.f32 0.0, %v863
    %v865 = vpop.f32.mrb[0].mxu0
    %v866 = vadd.f32 0.0, %v865
    %v867 = vpop.f32.mrb[0].mxu0
    %v868 = vpop.f32.mrb[0].mxu0
    %869 = vdwg.mxu0
    %v870 = vrot.slane %v823, 4
    %v871 = vadd.f32 %v823, %v870
    %v872 = vrot.slane %v871, 2
    %v873 = vadd.f32 %v871, %v872
    %v874 = vrot.slane %v873, 1
    %v875 = vadd.f32 %v873, %v874
    %v876 = vrot.slane %v825, 4
    %v877 = vadd.f32 %v825, %v876
    %v878 = vrot.slane %v877, 2
    %v879 = vadd.f32 %v877, %v878
    %v880 = vrot.slane %v879, 1
    %v881 = vadd.f32 %v879, %v880
    %v882 = vrot.slane %v864, 4
    %v883 = vadd.f32 %v864, %v882
    %v884 = vrot.slane %v883, 2
    %v885 = vadd.f32 %v883, %v884
    %v886 = vrot.slane %v885, 1
    %v887 = vadd.f32 %v885, %v886
    %v888 = vrot.slane %v866, 4
    %v889 = vadd.f32 %v866, %v888
    %v890 = vrot.slane %v889, 2
    %v891 = vadd.f32 %v889, %v890
    %v892 = vrot.slane %v891, 1
    %v893 = vadd.f32 %v891, %v892
    %v894 = vmul.f32 %v875, %v369
    %v895 = vmul.f32 %v881, %v369
    %v896 = vmul.f32 %v887, %v369
    %v897 = vmul.f32 %v893, %v369
    %v898 = vsub.f32 %v823, %v894
    %v899 = vsub.f32 %v825, %v895
    %v900 = vsub.f32 %v864, %v896
    %v901 = vsub.f32 %v866, %v897
    %v902 = vmul.f32 %v898, %v898
    %v903 = vmul.f32 %v899, %v899
    %v904 = vmul.f32 %v900, %v900
    %v905 = vmul.f32 %v901, %v901
    %v906 = vrot.slane %v902, 4
    %v907 = vadd.f32 %v902, %v906
    %v908 = vrot.slane %v907, 2
    %v909 = vadd.f32 %v907, %v908
    %v910 = vrot.slane %v909, 1
    %v911 = vadd.f32 %v909, %v910
    %v912 = vrot.slane %v903, 4
    %v913 = vadd.f32 %v903, %v912
    %v914 = vrot.slane %v913, 2
    %v915 = vadd.f32 %v913, %v914
    %v916 = vrot.slane %v915, 1
    %v917 = vadd.f32 %v915, %v916
    %v918 = vrot.slane %v904, 4
    %v919 = vadd.f32 %v904, %v918
    %v920 = vrot.slane %v919, 2
    %v921 = vadd.f32 %v919, %v920
    %v922 = vrot.slane %v921, 1
    %v923 = vadd.f32 %v921, %v922
    %v924 = vrot.slane %v905, 4
    %v925 = vadd.f32 %v905, %v924
    %v926 = vrot.slane %v925, 2
    %v927 = vadd.f32 %v925, %v926
    %v928 = vrot.slane %v927, 1
    %v929 = vadd.f32 %v927, %v928
    %v930 = vmul.f32 %v911, %v369
    %v931 = vmul.f32 %v917, %v369
    %v932 = vmul.f32 %v923, %v369
    %v933 = vmul.f32 %v929, %v369
    %v934 = vadd.f32 %v930, 0.8
    %v935 = vadd.f32 %v931, 0.8
    %v936 = vadd.f32 %v932, 0.8
    %v937 = vadd.f32 %v933, 0.8
    %v938 = vrsqrt.pop %v934
    %v939 = vrsqrt.pop %v935
    %v940 = vrsqrt.pop %v936
    %v941 = vrsqrt.pop %v937
    %v942 = vmul.f32 %v898, %v938
    %v943 = vmul.f32 %v899, %v939
    %v944 = vmul.f32 %v900, %v940
    %v945 = vmul.f32 %v901, %v941
    %vm946 = vcmp.gt.f32.partialorder %v942, 0.0
    %vm947 = vcmp.gt.f32.partialorder %v943, 0.0
    %vm948 = vcmp.gt.f32.partialorder %v944, 0.0
    %vm949 = vcmp.gt.f32.partialorder %v945, 0.0
    %v950 = vmul.f32 %v942, 0.2
    %v951 = vmul.f32 %v943, 0.2
    %v952 = vmul.f32 %v944, 0.2
    %v953 = vmul.f32 %v945, 0.2
    %v954 = vsel %vm946, %v942, %v950
    %v955 = vsel %vm947, %v943, %v951
    %v956 = vsel %vm948, %v944, %v952
    %v957 = vsel %vm949, %v945, %v953
    %s958 = smul.u32 4, 64
    %s959 = smul.u32 %s958, 8
    %s960 = sshll.u32 %s959, 4
    %961 = dma.done [#allocation4], %s960
    %v962 = vld [vmem:[#allocation2] sm:$0xff]
    %v963 = vld [vmem:[#allocation2 + $0x8] sm:$0xff]
    %v964 = vld [vmem:[#allocation2 + $0x10] sm:$0xff]
    %v965 = vld [vmem:[#allocation2 + $0x18] sm:$0xff]
    %v966 = vld [vmem:[#allocation2 + $0x20] sm:$0xff]
    %v967 = vld [vmem:[#allocation2 + $0x28] sm:$0xff]
    %v968 = vld [vmem:[#allocation2 + $0x30] sm:$0xff]
    %v969 = vld [vmem:[#allocation2 + $0x38] sm:$0xff]
    %v970 = vld [vmem:[#allocation2 + $0x40] sm:$0xff]
    %v971 = vld [vmem:[#allocation2 + $0x48] sm:$0xff]
    %v972 = vld [vmem:[#allocation2 + $0x50] sm:$0xff]
    %v973 = vld [vmem:[#allocation2 + $0x58] sm:$0xff]
    %v974 = vld [vmem:[#allocation2 + $0x60] sm:$0xff]
    %v975 = vld [vmem:[#allocation2 + $0x68] sm:$0xff]
    %v976 = vld [vmem:[#allocation2 + $0x70] sm:$0xff]
    %v977 = vld [vmem:[#allocation2 + $0x78] sm:$0xff]
    %v978 = vld [vmem:[#allocation2 + $0x80] sm:$0xff]
    %v979 = vld [vmem:[#allocation2 + $0x88] sm:$0xff]
    %v980 = vld [vmem:[#allocation2 + $0x90] sm:$0xff]
    %v981 = vld [vmem:[#allocation2 + $0x98] sm:$0xff]
    %v982 = vld [vmem:[#allocation2 + $0xa0] sm:$0xff]
    %v983 = vld [vmem:[#allocation2 + $0xa8] sm:$0xff]
    %v984 = vld [vmem:[#allocation2 + $0xb0] sm:$0xff]
    %v985 = vld [vmem:[#allocation2 + $0xb8] sm:$0xff]
    %v986 = vld [vmem:[#allocation2 + $0xc0] sm:$0xff]
    %v987 = vld [vmem:[#allocation2 + $0xc8] sm:$0xff]
    %v988 = vld [vmem:[#allocation2 + $0xd0] sm:$0xff]
    %v989 = vld [vmem:[#allocation2 + $0xd8] sm:$0xff]
    %v990 = vld [vmem:[#allocation2 + $0xe0] sm:$0xff]
    %v991 = vld [vmem:[#allocation2 + $0xe8] sm:$0xff]
    %v992 = vld [vmem:[#allocation2 + $0xf0] sm:$0xff]
    %v993 = vld [vmem:[#allocation2 + $0xf8] sm:$0xff]
    %v994 = vld [vmem:[#allocation2 + $0x100] sm:$0xff]
    %v995 = vld [vmem:[#allocation2 + $0x108] sm:$0xff]
    %v996 = vld [vmem:[#allocation2 + $0x110] sm:$0xff]
    %v997 = vld [vmem:[#allocation2 + $0x118] sm:$0xff]
    %v998 = vld [vmem:[#allocation2 + $0x120] sm:$0xff]
    %v999 = vld [vmem:[#allocation2 + $0x128] sm:$0xff]
    %v1000 = vld [vmem:[#allocation2 + $0x130] sm:$0xff]
    %v1001 = vld [vmem:[#allocation2 + $0x138] sm:$0xff]
    %v1002 = vld [vmem:[#allocation2 + $0x140] sm:$0xff]
    %v1003 = vld [vmem:[#allocation2 + $0x148] sm:$0xff]
    %v1004 = vld [vmem:[#allocation2 + $0x150] sm:$0xff]
    %v1005 = vld [vmem:[#allocation2 + $0x158] sm:$0xff]
    %v1006 = vld [vmem:[#allocation2 + $0x160] sm:$0xff]
    %v1007 = vld [vmem:[#allocation2 + $0x168] sm:$0xff]
    %v1008 = vld [vmem:[#allocation2 + $0x170] sm:$0xff]
    %v1009 = vld [vmem:[#allocation2 + $0x178] sm:$0xff]
    %v1010 = vld [vmem:[#allocation2 + $0x180] sm:$0xff]
    %v1011 = vld [vmem:[#allocation2 + $0x188] sm:$0xff]
    %v1012 = vld [vmem:[#allocation2 + $0x190] sm:$0xff]
    %v1013 = vld [vmem:[#allocation2 + $0x198] sm:$0xff]
    %v1014 = vld [vmem:[#allocation2 + $0x1a0] sm:$0xff]
    %v1015 = vld [vmem:[#allocation2 + $0x1a8] sm:$0xff]
    %v1016 = vld [vmem:[#allocation2 + $0x1b0] sm:$0xff]
    %v1017 = vld [vmem:[#allocation2 + $0x1b8] sm:$0xff]
    %v1018 = vld [vmem:[#allocation2 + $0x1c0] sm:$0xff]
    %v1019 = vld [vmem:[#allocation2 + $0x1c8] sm:$0xff]
    %v1020 = vld [vmem:[#allocation2 + $0x1d0] sm:$0xff]
    %v1021 = vld [vmem:[#allocation2 + $0x1d8] sm:$0xff]
    %v1022 = vld [vmem:[#allocation2 + $0x1e0] sm:$0xff]
    %v1023 = vld [vmem:[#allocation2 + $0x1e8] sm:$0xff]
    %v1024 = vld [vmem:[#allocation2 + $0x1f0] sm:$0xff]
    %v1025 = vld [vmem:[#allocation2 + $0x1f8] sm:$0xff]
    %v1026 = vld [vmem:[#allocation2 + $0x200] sm:$0xff]
    %v1027 = vld [vmem:[#allocation2 + $0x208] sm:$0xff]
    %v1028 = vld [vmem:[#allocation2 + $0x210] sm:$0xff]
    %v1029 = vld [vmem:[#allocation2 + $0x218] sm:$0xff]
    %v1030 = vld [vmem:[#allocation2 + $0x220] sm:$0xff]
    %v1031 = vld [vmem:[#allocation2 + $0x228] sm:$0xff]
    %v1032 = vld [vmem:[#allocation2 + $0x230] sm:$0xff]
    %v1033 = vld [vmem:[#allocation2 + $0x238] sm:$0xff]
    %v1034 = vld [vmem:[#allocation2 + $0x240] sm:$0xff]
    %v1035 = vld [vmem:[#allocation2 + $0x248] sm:$0xff]
    %v1036 = vld [vmem:[#allocation2 + $0x250] sm:$0xff]
    %v1037 = vld [vmem:[#allocation2 + $0x258] sm:$0xff]
    %v1038 = vld [vmem:[#allocation2 + $0x260] sm:$0xff]
    %v1039 = vld [vmem:[#allocation2 + $0x268] sm:$0xff]
    %v1040 = vld [vmem:[#allocation2 + $0x270] sm:$0xff]
    %v1041 = vld [vmem:[#allocation2 + $0x278] sm:$0xff]
    %v1042 = vld [vmem:[#allocation2 + $0x280] sm:$0xff]
    %v1043 = vld [vmem:[#allocation2 + $0x288] sm:$0xff]
    %v1044 = vld [vmem:[#allocation2 + $0x290] sm:$0xff]
    %v1045 = vld [vmem:[#allocation2 + $0x298] sm:$0xff]
    %v1046 = vld [vmem:[#allocation2 + $0x2a0] sm:$0xff]
    %v1047 = vld [vmem:[#allocation2 + $0x2a8] sm:$0xff]
    %v1048 = vld [vmem:[#allocation2 + $0x2b0] sm:$0xff]
    %v1049 = vld [vmem:[#allocation2 + $0x2b8] sm:$0xff]
    %v1050 = vld [vmem:[#allocation2 + $0x2c0] sm:$0xff]
    %v1051 = vld [vmem:[#allocation2 + $0x2c8] sm:$0xff]
    %v1052 = vld [vmem:[#allocation2 + $0x2d0] sm:$0xff]
    %v1053 = vld [vmem:[#allocation2 + $0x2d8] sm:$0xff]
    %v1054 = vld [vmem:[#allocation2 + $0x2e0] sm:$0xff]
    %v1055 = vld [vmem:[#allocation2 + $0x2e8] sm:$0xff]
    %v1056 = vld [vmem:[#allocation2 + $0x2f0] sm:$0xff]
    %v1057 = vld [vmem:[#allocation2 + $0x2f8] sm:$0xff]
    %v1058 = vld [vmem:[#allocation2 + $0x300] sm:$0xff]
    %v1059 = vld [vmem:[#allocation2 + $0x308] sm:$0xff]
    %v1060 = vld [vmem:[#allocation2 + $0x310] sm:$0xff]
    %v1061 = vld [vmem:[#allocation2 + $0x318] sm:$0xff]
    %v1062 = vld [vmem:[#allocation2 + $0x320] sm:$0xff]
    %v1063 = vld [vmem:[#allocation2 + $0x328] sm:$0xff]
    %v1064 = vld [vmem:[#allocation2 + $0x330] sm:$0xff]
    %v1065 = vld [vmem:[#allocation2 + $0x338] sm:$0xff]
    %v1066 = vld [vmem:[#allocation2 + $0x340] sm:$0xff]
    %v1067 = vld [vmem:[#allocation2 + $0x348] sm:$0xff]
    %v1068 = vld [vmem:[#allocation2 + $0x350] sm:$0xff]
    %v1069 = vld [vmem:[#allocation2 + $0x358] sm:$0xff]
    %v1070 = vld [vmem:[#allocation2 + $0x360] sm:$0xff]
    %v1071 = vld [vmem:[#allocation2 + $0x368] sm:$0xff]
    %v1072 = vld [vmem:[#allocation2 + $0x370] sm:$0xff]
    %v1073 = vld [vmem:[#allocation2 + $0x378] sm:$0xff]
    %v1074 = vld [vmem:[#allocation2 + $0x380] sm:$0xff]
    %v1075 = vld [vmem:[#allocation2 + $0x388] sm:$0xff]
    %v1076 = vld [vmem:[#allocation2 + $0x390] sm:$0xff]
    %v1077 = vld [vmem:[#allocation2 + $0x398] sm:$0xff]
    %v1078 = vld [vmem:[#allocation2 + $0x3a0] sm:$0xff]
    %v1079 = vld [vmem:[#allocation2 + $0x3a8] sm:$0xff]
    %v1080 = vld [vmem:[#allocation2 + $0x3b0] sm:$0xff]
    %v1081 = vld [vmem:[#allocation2 + $0x3b8] sm:$0xff]
    %v1082 = vld [vmem:[#allocation2 + $0x3c0] sm:$0xff]
    %v1083 = vld [vmem:[#allocation2 + $0x3c8] sm:$0xff]
    %v1084 = vld [vmem:[#allocation2 + $0x3d0] sm:$0xff]
    %v1085 = vld [vmem:[#allocation2 + $0x3d8] sm:$0xff]
    %v1086 = vld [vmem:[#allocation2 + $0x3e0] sm:$0xff]
    %v1087 = vld [vmem:[#allocation2 + $0x3e8] sm:$0xff]
    %v1088 = vld [vmem:[#allocation2 + $0x3f0] sm:$0xff]
    %v1089 = vld [vmem:[#allocation2 + $0x3f8] sm:$0xff]
    %v1090 = vld [vmem:[#allocation2 + $0x400] sm:$0xff]
    %v1091 = vld [vmem:[#allocation2 + $0x408] sm:$0xff]
    %v1092 = vld [vmem:[#allocation2 + $0x410] sm:$0xff]
    %v1093 = vld [vmem:[#allocation2 + $0x418] sm:$0xff]
    %v1094 = vld [vmem:[#allocation2 + $0x420] sm:$0xff]
    %v1095 = vld [vmem:[#allocation2 + $0x428] sm:$0xff]
    %v1096 = vld [vmem:[#allocation2 + $0x430] sm:$0xff]
    %v1097 = vld [vmem:[#allocation2 + $0x438] sm:$0xff]
    %v1098 = vld [vmem:[#allocation2 + $0x440] sm:$0xff]
    %v1099 = vld [vmem:[#allocation2 + $0x448] sm:$0xff]
    %v1100 = vld [vmem:[#allocation2 + $0x450] sm:$0xff]
    %v1101 = vld [vmem:[#allocation2 + $0x458] sm:$0xff]
    %v1102 = vld [vmem:[#allocation2 + $0x460] sm:$0xff]
    %v1103 = vld [vmem:[#allocation2 + $0x468] sm:$0xff]
    %v1104 = vld [vmem:[#allocation2 + $0x470] sm:$0xff]
    %v1105 = vld [vmem:[#allocation2 + $0x478] sm:$0xff]
    %v1106 = vld [vmem:[#allocation2 + $0x480] sm:$0xff]
    %v1107 = vld [vmem:[#allocation2 + $0x488] sm:$0xff]
    %v1108 = vld [vmem:[#allocation2 + $0x490] sm:$0xff]
    %v1109 = vld [vmem:[#allocation2 + $0x498] sm:$0xff]
    %v1110 = vld [vmem:[#allocation2 + $0x4a0] sm:$0xff]
    %v1111 = vld [vmem:[#allocation2 + $0x4a8] sm:$0xff]
    %v1112 = vld [vmem:[#allocation2 + $0x4b0] sm:$0xff]
    %v1113 = vld [vmem:[#allocation2 + $0x4b8] sm:$0xff]
    %v1114 = vld [vmem:[#allocation2 + $0x4c0] sm:$0xff]
    %v1115 = vld [vmem:[#allocation2 + $0x4c8] sm:$0xff]
    %v1116 = vld [vmem:[#allocation2 + $0x4d0] sm:$0xff]
    %v1117 = vld [vmem:[#allocation2 + $0x4d8] sm:$0xff]
    %v1118 = vld [vmem:[#allocation2 + $0x4e0] sm:$0xff]
    %v1119 = vld [vmem:[#allocation2 + $0x4e8] sm:$0xff]
    %v1120 = vld [vmem:[#allocation2 + $0x4f0] sm:$0xff]
    %v1121 = vld [vmem:[#allocation2 + $0x4f8] sm:$0xff]
    %v1122 = vld [vmem:[#allocation2 + $0x500] sm:$0xff]
    %v1123 = vld [vmem:[#allocation2 + $0x508] sm:$0xff]
    %v1124 = vld [vmem:[#allocation2 + $0x510] sm:$0xff]
    %v1125 = vld [vmem:[#allocation2 + $0x518] sm:$0xff]
    %v1126 = vld [vmem:[#allocation2 + $0x520] sm:$0xff]
    %v1127 = vld [vmem:[#allocation2 + $0x528] sm:$0xff]
    %v1128 = vld [vmem:[#allocation2 + $0x530] sm:$0xff]
    %v1129 = vld [vmem:[#allocation2 + $0x538] sm:$0xff]
    %v1130 = vld [vmem:[#allocation2 + $0x540] sm:$0xff]
    %v1131 = vld [vmem:[#allocation2 + $0x548] sm:$0xff]
    %v1132 = vld [vmem:[#allocation2 + $0x550] sm:$0xff]
    %v1133 = vld [vmem:[#allocation2 + $0x558] sm:$0xff]
    %v1134 = vld [vmem:[#allocation2 + $0x560] sm:$0xff]
    %v1135 = vld [vmem:[#allocation2 + $0x568] sm:$0xff]
    %v1136 = vld [vmem:[#allocation2 + $0x570] sm:$0xff]
    %v1137 = vld [vmem:[#allocation2 + $0x578] sm:$0xff]
    %v1138 = vld [vmem:[#allocation2 + $0x580] sm:$0xff]
    %v1139 = vld [vmem:[#allocation2 + $0x588] sm:$0xff]
    %v1140 = vld [vmem:[#allocation2 + $0x590] sm:$0xff]
    %v1141 = vld [vmem:[#allocation2 + $0x598] sm:$0xff]
    %v1142 = vld [vmem:[#allocation2 + $0x5a0] sm:$0xff]
    %v1143 = vld [vmem:[#allocation2 + $0x5a8] sm:$0xff]
    %v1144 = vld [vmem:[#allocation2 + $0x5b0] sm:$0xff]
    %v1145 = vld [vmem:[#allocation2 + $0x5b8] sm:$0xff]
    %v1146 = vld [vmem:[#allocation2 + $0x5c0] sm:$0xff]
    %v1147 = vld [vmem:[#allocation2 + $0x5c8] sm:$0xff]
    %v1148 = vld [vmem:[#allocation2 + $0x5d0] sm:$0xff]
    %v1149 = vld [vmem:[#allocation2 + $0x5d8] sm:$0xff]
    %v1150 = vld [vmem:[#allocation2 + $0x5e0] sm:$0xff]
    %v1151 = vld [vmem:[#allocation2 + $0x5e8] sm:$0xff]
    %v1152 = vld [vmem:[#allocation2 + $0x5f0] sm:$0xff]
    %v1153 = vld [vmem:[#allocation2 + $0x5f8] sm:$0xff]
    %v1154 = vld [vmem:[#allocation2 + $0x600] sm:$0xff]
    %v1155 = vld [vmem:[#allocation2 + $0x608] sm:$0xff]
    %v1156 = vld [vmem:[#allocation2 + $0x610] sm:$0xff]
    %v1157 = vld [vmem:[#allocation2 + $0x618] sm:$0xff]
    %v1158 = vld [vmem:[#allocation2 + $0x620] sm:$0xff]
    %v1159 = vld [vmem:[#allocation2 + $0x628] sm:$0xff]
    %v1160 = vld [vmem:[#allocation2 + $0x630] sm:$0xff]
    %v1161 = vld [vmem:[#allocation2 + $0x638] sm:$0xff]
    %v1162 = vld [vmem:[#allocation2 + $0x640] sm:$0xff]
    %v1163 = vld [vmem:[#allocation2 + $0x648] sm:$0xff]
    %v1164 = vld [vmem:[#allocation2 + $0x650] sm:$0xff]
    %v1165 = vld [vmem:[#allocation2 + $0x658] sm:$0xff]
    %v1166 = vld [vmem:[#allocation2 + $0x660] sm:$0xff]
    %v1167 = vld [vmem:[#allocation2 + $0x668] sm:$0xff]
    %v1168 = vld [vmem:[#allocation2 + $0x670] sm:$0xff]
    %v1169 = vld [vmem:[#allocation2 + $0x678] sm:$0xff]
    %v1170 = vld [vmem:[#allocation2 + $0x680] sm:$0xff]
    %v1171 = vld [vmem:[#allocation2 + $0x688] sm:$0xff]
    %v1172 = vld [vmem:[#allocation2 + $0x690] sm:$0xff]
    %v1173 = vld [vmem:[#allocation2 + $0x698] sm:$0xff]
    %v1174 = vld [vmem:[#allocation2 + $0x6a0] sm:$0xff]
    %v1175 = vld [vmem:[#allocation2 + $0x6a8] sm:$0xff]
    %v1176 = vld [vmem:[#allocation2 + $0x6b0] sm:$0xff]
    %v1177 = vld [vmem:[#allocation2 + $0x6b8] sm:$0xff]
    %v1178 = vld [vmem:[#allocation2 + $0x6c0] sm:$0xff]
    %v1179 = vld [vmem:[#allocation2 + $0x6c8] sm:$0xff]
    %v1180 = vld [vmem:[#allocation2 + $0x6d0] sm:$0xff]
    %v1181 = vld [vmem:[#allocation2 + $0x6d8] sm:$0xff]
    %v1182 = vld [vmem:[#allocation2 + $0x6e0] sm:$0xff]
    %v1183 = vld [vmem:[#allocation2 + $0x6e8] sm:$0xff]
    %v1184 = vld [vmem:[#allocation2 + $0x6f0] sm:$0xff]
    %v1185 = vld [vmem:[#allocation2 + $0x6f8] sm:$0xff]
    %v1186 = vld [vmem:[#allocation2 + $0x700] sm:$0xff]
    %v1187 = vld [vmem:[#allocation2 + $0x708] sm:$0xff]
    %v1188 = vld [vmem:[#allocation2 + $0x710] sm:$0xff]
    %v1189 = vld [vmem:[#allocation2 + $0x718] sm:$0xff]
    %v1190 = vld [vmem:[#allocation2 + $0x720] sm:$0xff]
    %v1191 = vld [vmem:[#allocation2 + $0x728] sm:$0xff]
    %v1192 = vld [vmem:[#allocation2 + $0x730] sm:$0xff]
    %v1193 = vld [vmem:[#allocation2 + $0x738] sm:$0xff]
    %v1194 = vld [vmem:[#allocation2 + $0x740] sm:$0xff]
    %v1195 = vld [vmem:[#allocation2 + $0x748] sm:$0xff]
    %v1196 = vld [vmem:[#allocation2 + $0x750] sm:$0xff]
    %v1197 = vld [vmem:[#allocation2 + $0x758] sm:$0xff]
    %v1198 = vld [vmem:[#allocation2 + $0x760] sm:$0xff]
    %v1199 = vld [vmem:[#allocation2 + $0x768] sm:$0xff]
    %v1200 = vld [vmem:[#allocation2 + $0x770] sm:$0xff]
    %v1201 = vld [vmem:[#allocation2 + $0x778] sm:$0xff]
    %v1202 = vld [vmem:[#allocation2 + $0x780] sm:$0xff]
    %v1203 = vld [vmem:[#allocation2 + $0x788] sm:$0xff]
    %v1204 = vld [vmem:[#allocation2 + $0x790] sm:$0xff]
    %v1205 = vld [vmem:[#allocation2 + $0x798] sm:$0xff]
    %v1206 = vld [vmem:[#allocation2 + $0x7a0] sm:$0xff]
    %v1207 = vld [vmem:[#allocation2 + $0x7a8] sm:$0xff]
    %v1208 = vld [vmem:[#allocation2 + $0x7b0] sm:$0xff]
    %v1209 = vld [vmem:[#allocation2 + $0x7b8] sm:$0xff]
    %v1210 = vld [vmem:[#allocation2 + $0x7c0] sm:$0xff]
    %v1211 = vld [vmem:[#allocation2 + $0x7c8] sm:$0xff]
    %v1212 = vld [vmem:[#allocation2 + $0x7d0] sm:$0xff]
    %v1213 = vld [vmem:[#allocation2 + $0x7d8] sm:$0xff]
    %v1214 = vld [vmem:[#allocation2 + $0x7e0] sm:$0xff]
    %v1215 = vld [vmem:[#allocation2 + $0x7e8] sm:$0xff]
    %v1216 = vld [vmem:[#allocation2 + $0x7f0] sm:$0xff]
    %v1217 = vld [vmem:[#allocation2 + $0x7f8] sm:$0xff]
    %v1218 = vpack.c.bf16 %v954, %v954
    %v1219 = vpack.c.bf16 %v955, %v955
    %v1220 = vpack.c.bf16 %v956, %v956
    %v1221 = vpack.c.bf16 %v957, %v957
    %1222 = vmatprep.subr.bf16.mxu0 %v963
    %1223 = vmatpush1.bf16.msra.mxu0 %v962
    %1224 = vmatprep.subr.bf16.mxu0 %v971
    %1225 = vmatpush1.bf16.msra.mxu0 %v970
    %1226 = vmatprep.subr.bf16.mxu0 %v979
    %1227 = vmatpush1.bf16.msra.mxu0 %v978
    %1228 = vmatprep.subr.bf16.mxu0 %v987
    %1229 = vmatpush1.bf16.msra.mxu0 %v986
    %1230 = vmatprep.subr.bf16.mxu0 %v995
    %1231 = vmatpush1.bf16.msra.mxu0 %v994
    %1232 = vmatprep.subr.bf16.mxu0 %v1003
    %1233 = vmatpush1.bf16.msra.mxu0 %v1002
    %1234 = vmatprep.subr.bf16.mxu0 %v1011
    %1235 = vmatpush1.bf16.msra.mxu0 %v1010
    %1236 = vmatprep.subr.bf16.mxu0 %v1019
    %1237 = vmatpush1.bf16.msra.mxu0 %v1018
    %1238 = vmatprep.subr.bf16.mxu0 %v1027
    %1239 = vmatpush1.bf16.msra.mxu0 %v1026
    %1240 = vmatprep.subr.bf16.mxu0 %v1035
    %1241 = vmatpush1.bf16.msra.mxu0 %v1034
    %1242 = vmatprep.subr.bf16.mxu0 %v1043
    %1243 = vmatpush1.bf16.msra.mxu0 %v1042
    %1244 = vmatprep.subr.bf16.mxu0 %v1051
    %1245 = vmatpush1.bf16.msra.mxu0 %v1050
    %1246 = vmatprep.subr.bf16.mxu0 %v1059
    %1247 = vmatpush1.bf16.msra.mxu0 %v1058
    %1248 = vmatprep.subr.bf16.mxu0 %v1067
    %1249 = vmatpush1.bf16.msra.mxu0 %v1066
    %1250 = vmatprep.subr.bf16.mxu0 %v1075
    %1251 = vmatpush1.bf16.msra.mxu0 %v1074
    %1252 = vmatprep.subr.bf16.mxu0 %v1083
    %1253 = vmatpush1.bf16.msra.mxu0 %v1082
    %1254 = vmatprep.mubr.bf16.mxu0 %v1219
    %1255 = vmatmul.mubr.bf16.gmra.mrb[0].mxu0 %v1218
    %v1256 = vpop.f32.mrb[0].mxu0
    %v1257 = vadd.f32 0.0, %v1256
    %v1258 = vpop.f32.mrb[0].mxu0
    %v1259 = vadd.f32 0.0, %v1258
    %v1260 = vpop.f32.mrb[0].mxu0
    %v1261 = vpop.f32.mrb[0].mxu0
    %1262 = vdwg.mxu0
    %1263 = vmatprep.subr.bf16.mxu0 %v1091
    %1264 = vmatpush1.bf16.msra.mxu0 %v1090
    %1265 = vmatprep.subr.bf16.mxu0 %v1099
    %1266 = vmatpush1.bf16.msra.mxu0 %v1098
    %1267 = vmatprep.subr.bf16.mxu0 %v1107
    %1268 = vmatpush1.bf16.msra.mxu0 %v1106
    %1269 = vmatprep.subr.bf16.mxu0 %v1115
    %1270 = vmatpush1.bf16.msra.mxu0 %v1114
    %1271 = vmatprep.subr.bf16.mxu0 %v1123
    %1272 = vmatpush1.bf16.msra.mxu0 %v1122
    %1273 = vmatprep.subr.bf16.mxu0 %v1131
    %1274 = vmatpush1.bf16.msra.mxu0 %v1130
    %1275 = vmatprep.subr.bf16.mxu0 %v1139
    %1276 = vmatpush1.bf16.msra.mxu0 %v1138
    %1277 = vmatprep.subr.bf16.mxu0 %v1147
    %1278 = vmatpush1.bf16.msra.mxu0 %v1146
    %1279 = vmatprep.subr.bf16.mxu0 %v1155
    %1280 = vmatpush1.bf16.msra.mxu0 %v1154
    %1281 = vmatprep.subr.bf16.mxu0 %v1163
    %1282 = vmatpush1.bf16.msra.mxu0 %v1162
    %1283 = vmatprep.subr.bf16.mxu0 %v1171
    %1284 = vmatpush1.bf16.msra.mxu0 %v1170
    %1285 = vmatprep.subr.bf16.mxu0 %v1179
    %1286 = vmatpush1.bf16.msra.mxu0 %v1178
    %1287 = vmatprep.subr.bf16.mxu0 %v1187
    %1288 = vmatpush1.bf16.msra.mxu0 %v1186
    %1289 = vmatprep.subr.bf16.mxu0 %v1195
    %1290 = vmatpush1.bf16.msra.mxu0 %v1194
    %1291 = vmatprep.subr.bf16.mxu0 %v1203
    %1292 = vmatpush1.bf16.msra.mxu0 %v1202
    %1293 = vmatprep.subr.bf16.mxu0 %v1211
    %1294 = vmatpush1.bf16.msra.mxu0 %v1210
    %1295 = vmatprep.mubr.bf16.mxu0 %v1221
    %1296 = vmatmul.mubr.bf16.gmra.mrb[0].mxu0 %v1220
    %v1297 = vpop.f32.mrb[0].mxu0
    %v1298 = vadd.f32 %v1257, %v1297
    %v1299 = vpop.f32.mrb[0].mxu0
    %v1300 = vadd.f32 %v1259, %v1299
    %v1301 = vpop.f32.mrb[0].mxu0
    %v1302 = vpop.f32.mrb[0].mxu0
    %1303 = vdwg.mxu0
    %1304 = vmatprep.subr.bf16.mxu0 %v965
    %1305 = vmatpush1.bf16.msra.mxu0 %v964
    %1306 = vmatprep.subr.bf16.mxu0 %v973
    %1307 = vmatpush1.bf16.msra.mxu0 %v972
    %1308 = vmatprep.subr.bf16.mxu0 %v981
    %1309 = vmatpush1.bf16.msra.mxu0 %v980
    %1310 = vmatprep.subr.bf16.mxu0 %v989
    %1311 = vmatpush1.bf16.msra.mxu0 %v988
    %1312 = vmatprep.subr.bf16.mxu0 %v997
    %1313 = vmatpush1.bf16.msra.mxu0 %v996
    %1314 = vmatprep.subr.bf16.mxu0 %v1005
    %1315 = vmatpush1.bf16.msra.mxu0 %v1004
    %1316 = vmatprep.subr.bf16.mxu0 %v1013
    %1317 = vmatpush1.bf16.msra.mxu0 %v1012
    %1318 = vmatprep.subr.bf16.mxu0 %v1021
    %1319 = vmatpush1.bf16.msra.mxu0 %v1020
    %1320 = vmatprep.subr.bf16.mxu0 %v1029
    %1321 = vmatpush1.bf16.msra.mxu0 %v1028
    %1322 = vmatprep.subr.bf16.mxu0 %v1037
    %1323 = vmatpush1.bf16.msra.mxu0 %v1036
    %1324 = vmatprep.subr.bf16.mxu0 %v1045
    %1325 = vmatpush1.bf16.msra.mxu0 %v1044
    %1326 = vmatprep.subr.bf16.mxu0 %v1053
    %1327 = vmatpush1.bf16.msra.mxu0 %v1052
    %1328 = vmatprep.subr.bf16.mxu0 %v1061
    %1329 = vmatpush1.bf16.msra.mxu0 %v1060
    %1330 = vmatprep.subr.bf16.mxu0 %v1069
    %1331 = vmatpush1.bf16.msra.mxu0 %v1068
    %1332 = vmatprep.subr.bf16.mxu0 %v1077
    %1333 = vmatpush1.bf16.msra.mxu0 %v1076
    %1334 = vmatprep.subr.bf16.mxu0 %v1085
    %1335 = vmatpush1.bf16.msra.mxu0 %v1084
    %1336 = vmatprep.mubr.bf16.mxu0 %v1219
    %1337 = vmatmul.mubr.bf16.gmra.mrb[0].mxu0 %v1218
    %v1338 = vpop.f32.mrb[0].mxu0
    %v1339 = vadd.f32 0.0, %v1338
    %v1340 = vpop.f32.mrb[0].mxu0
    %v1341 = vadd.f32 0.0, %v1340
    %v1342 = vpop.f32.mrb[0].mxu0
    %v1343 = vpop.f32.mrb[0].mxu0
    %1344 = vdwg.mxu0
    %1345 = vmatprep.subr.bf16.mxu0 %v1093
    %1346 = vmatpush1.bf16.msra.mxu0 %v1092
    %1347 = vmatprep.subr.bf16.mxu0 %v1101
    %1348 = vmatpush1.bf16.msra.mxu0 %v1100
    %1349 = vmatprep.subr.bf16.mxu0 %v1109
    %1350 = vmatpush1.bf16.msra.mxu0 %v1108
    %1351 = vmatprep.subr.bf16.mxu0 %v1117
    %1352 = vmatpush1.bf16.msra.mxu0 %v1116
    %1353 = vmatprep.subr.bf16.mxu0 %v1125
    %1354 = vmatpush1.bf16.msra.mxu0 %v1124
    %1355 = vmatprep.subr.bf16.mxu0 %v1133
    %1356 = vmatpush1.bf16.msra.mxu0 %v1132
    %1357 = vmatprep.subr.bf16.mxu0 %v1141
    %1358 = vmatpush1.bf16.msra.mxu0 %v1140
    %1359 = vmatprep.subr.bf16.mxu0 %v1149
    %1360 = vmatpush1.bf16.msra.mxu0 %v1148
    %1361 = vmatprep.subr.bf16.mxu0 %v1157
    %1362 = vmatpush1.bf16.msra.mxu0 %v1156
    %1363 = vmatprep.subr.bf16.mxu0 %v1165
    %1364 = vmatpush1.bf16.msra.mxu0 %v1164
    %1365 = vmatprep.subr.bf16.mxu0 %v1173
    %1366 = vmatpush1.bf16.msra.mxu0 %v1172
    %1367 = vmatprep.subr.bf16.mxu0 %v1181
    %1368 = vmatpush1.bf16.msra.mxu0 %v1180
    %1369 = vmatprep.subr.bf16.mxu0 %v1189
    %1370 = vmatpush1.bf16.msra.mxu0 %v1188
    %1371 = vmatprep.subr.bf16.mxu0 %v1197
    %1372 = vmatpush1.bf16.msra.mxu0 %v1196
    %1373 = vmatprep.subr.bf16.mxu0 %v1205
    %1374 = vmatpush1.bf16.msra.mxu0 %v1204
    %1375 = vmatprep.subr.bf16.mxu0 %v1213
    %1376 = vmatpush1.bf16.msra.mxu0 %v1212
    %1377 = vmatprep.mubr.bf16.mxu0 %v1221
    %1378 = vmatmul.mubr.bf16.gmra.mrb[0].mxu0 %v1220
    %v1379 = vpop.f32.mrb[0].mxu0
    %v1380 = vadd.f32 %v1339, %v1379
    %v1381 = vpop.f32.mrb[0].mxu0
    %v1382 = vadd.f32 %v1341, %v1381
    %v1383 = vpop.f32.mrb[0].mxu0
    %v1384 = vpop.f32.mrb[0].mxu0
    %1385 = vdwg.mxu0
    %1386 = vmatprep.subr.bf16.mxu0 %v967
    %1387 = vmatpush1.bf16.msra.mxu0 %v966
    %1388 = vmatprep.subr.bf16.mxu0 %v975
    %1389 = vmatpush1.bf16.msra.mxu0 %v974
    %1390 = vmatprep.subr.bf16.mxu0 %v983
    %1391 = vmatpush1.bf16.msra.mxu0 %v982
    %1392 = vmatprep.subr.bf16.mxu0 %v991
    %1393 = vmatpush1.bf16.msra.mxu0 %v990
    %1394 = vmatprep.subr.bf16.mxu0 %v999
    %1395 = vmatpush1.bf16.msra.mxu0 %v998
    %1396 = vmatprep.subr.bf16.mxu0 %v1007
    %1397 = vmatpush1.bf16.msra.mxu0 %v1006
    %1398 = vmatprep.subr.bf16.mxu0 %v1015
    %1399 = vmatpush1.bf16.msra.mxu0 %v1014
    %1400 = vmatprep.subr.bf16.mxu0 %v1023
    %1401 = vmatpush1.bf16.msra.mxu0 %v1022
    %1402 = vmatprep.subr.bf16.mxu0 %v1031
    %1403 = vmatpush1.bf16.msra.mxu0 %v1030
    %1404 = vmatprep.subr.bf16.mxu0 %v1039
    %1405 = vmatpush1.bf16.msra.mxu0 %v1038
    %1406 = vmatprep.subr.bf16.mxu0 %v1047
    %1407 = vmatpush1.bf16.msra.mxu0 %v1046
    %1408 = vmatprep.subr.bf16.mxu0 %v1055
    %1409 = vmatpush1.bf16.msra.mxu0 %v1054
    %1410 = vmatprep.subr.bf16.mxu0 %v1063
    %1411 = vmatpush1.bf16.msra.mxu0 %v1062
    %1412 = vmatprep.subr.bf16.mxu0 %v1071
    %1413 = vmatpush1.bf16.msra.mxu0 %v1070
    %1414 = vmatprep.subr.bf16.mxu0 %v1079
    %1415 = vmatpush1.bf16.msra.mxu0 %v1078
    %1416 = vmatprep.subr.bf16.mxu0 %v1087
    %1417 = vmatpush1.bf16.msra.mxu0 %v1086
    %1418 = vmatprep.mubr.bf16.mxu0 %v1219
    %1419 = vmatmul.mubr.bf16.gmra.mrb[0].mxu0 %v1218
    %v1420 = vpop.f32.mrb[0].mxu0
    %v1421 = vadd.f32 0.0, %v1420
    %v1422 = vpop.f32.mrb[0].mxu0
    %v1423 = vadd.f32 0.0, %v1422
    %v1424 = vpop.f32.mrb[0].mxu0
    %v1425 = vpop.f32.mrb[0].mxu0
    %1426 = vdwg.mxu0
    %1427 = vmatprep.subr.bf16.mxu0 %v1095
    %1428 = vmatpush1.bf16.msra.mxu0 %v1094
    %1429 = vmatprep.subr.bf16.mxu0 %v1103
    %1430 = vmatpush1.bf16.msra.mxu0 %v1102
    %1431 = vmatprep.subr.bf16.mxu0 %v1111
    %1432 = vmatpush1.bf16.msra.mxu0 %v1110
    %1433 = vmatprep.subr.bf16.mxu0 %v1119
    %1434 = vmatpush1.bf16.msra.mxu0 %v1118
    %1435 = vmatprep.subr.bf16.mxu0 %v1127
    %1436 = vmatpush1.bf16.msra.mxu0 %v1126
    %1437 = vmatprep.subr.bf16.mxu0 %v1135
    %1438 = vmatpush1.bf16.msra.mxu0 %v1134
    %1439 = vmatprep.subr.bf16.mxu0 %v1143
    %1440 = vmatpush1.bf16.msra.mxu0 %v1142
    %1441 = vmatprep.subr.bf16.mxu0 %v1151
    %1442 = vmatpush1.bf16.msra.mxu0 %v1150
    %1443 = vmatprep.subr.bf16.mxu0 %v1159
    %1444 = vmatpush1.bf16.msra.mxu0 %v1158
    %1445 = vmatprep.subr.bf16.mxu0 %v1167
    %1446 = vmatpush1.bf16.msra.mxu0 %v1166
    %1447 = vmatprep.subr.bf16.mxu0 %v1175
    %1448 = vmatpush1.bf16.msra.mxu0 %v1174
    %1449 = vmatprep.subr.bf16.mxu0 %v1183
    %1450 = vmatpush1.bf16.msra.mxu0 %v1182
    %1451 = vmatprep.subr.bf16.mxu0 %v1191
    %1452 = vmatpush1.bf16.msra.mxu0 %v1190
    %1453 = vmatprep.subr.bf16.mxu0 %v1199
    %1454 = vmatpush1.bf16.msra.mxu0 %v1198
    %1455 = vmatprep.subr.bf16.mxu0 %v1207
    %1456 = vmatpush1.bf16.msra.mxu0 %v1206
    %1457 = vmatprep.subr.bf16.mxu0 %v1215
    %1458 = vmatpush1.bf16.msra.mxu0 %v1214
    %1459 = vmatprep.mubr.bf16.mxu0 %v1221
    %1460 = vmatmul.mubr.bf16.gmra.mrb[0].mxu0 %v1220
    %v1461 = vpop.f32.mrb[0].mxu0
    %v1462 = vadd.f32 %v1421, %v1461
    %v1463 = vpop.f32.mrb[0].mxu0
    %v1464 = vadd.f32 %v1423, %v1463
    %v1465 = vpop.f32.mrb[0].mxu0
    %v1466 = vpop.f32.mrb[0].mxu0
    %1467 = vdwg.mxu0
    %1468 = vmatprep.subr.bf16.mxu0 %v969
    %1469 = vmatpush1.bf16.msra.mxu0 %v968
    %1470 = vmatprep.subr.bf16.mxu0 %v977
    %1471 = vmatpush1.bf16.msra.mxu0 %v976
    %1472 = vmatprep.subr.bf16.mxu0 %v985
    %1473 = vmatpush1.bf16.msra.mxu0 %v984
    %1474 = vmatprep.subr.bf16.mxu0 %v993
    %1475 = vmatpush1.bf16.msra.mxu0 %v992
    %1476 = vmatprep.subr.bf16.mxu0 %v1001
    %1477 = vmatpush1.bf16.msra.mxu0 %v1000
    %1478 = vmatprep.subr.bf16.mxu0 %v1009
    %1479 = vmatpush1.bf16.msra.mxu0 %v1008
    %1480 = vmatprep.subr.bf16.mxu0 %v1017
    %1481 = vmatpush1.bf16.msra.mxu0 %v1016
    %1482 = vmatprep.subr.bf16.mxu0 %v1025
    %1483 = vmatpush1.bf16.msra.mxu0 %v1024
    %1484 = vmatprep.subr.bf16.mxu0 %v1033
    %1485 = vmatpush1.bf16.msra.mxu0 %v1032
    %1486 = vmatprep.subr.bf16.mxu0 %v1041
    %1487 = vmatpush1.bf16.msra.mxu0 %v1040
    %1488 = vmatprep.subr.bf16.mxu0 %v1049
    %1489 = vmatpush1.bf16.msra.mxu0 %v1048
    %1490 = vmatprep.subr.bf16.mxu0 %v1057
    %1491 = vmatpush1.bf16.msra.mxu0 %v1056
    %1492 = vmatprep.subr.bf16.mxu0 %v1065
    %1493 = vmatpush1.bf16.msra.mxu0 %v1064
    %1494 = vmatprep.subr.bf16.mxu0 %v1073
    %1495 = vmatpush1.bf16.msra.mxu0 %v1072
    %1496 = vmatprep.subr.bf16.mxu0 %v1081
    %1497 = vmatpush1.bf16.msra.mxu0 %v1080
    %1498 = vmatprep.subr.bf16.mxu0 %v1089
    %1499 = vmatpush1.bf16.msra.mxu0 %v1088
    %1500 = vmatprep.mubr.bf16.mxu0 %v1219
    %1501 = vmatmul.mubr.bf16.gmra.mrb[0].mxu0 %v1218
    %v1502 = vpop.f32.mrb[0].mxu0
    %v1503 = vadd.f32 0.0, %v1502
    %v1504 = vpop.f32.mrb[0].mxu0
    %v1505 = vadd.f32 0.0, %v1504
    %v1506 = vpop.f32.mrb[0].mxu0
    %v1507 = vpop.f32.mrb[0].mxu0
    %1508 = vdwg.mxu0
    %1509 = vmatprep.subr.bf16.mxu0 %v1097
    %1510 = vmatpush1.bf16.msra.mxu0 %v1096
    %1511 = vmatprep.subr.bf16.mxu0 %v1105
    %1512 = vmatpush1.bf16.msra.mxu0 %v1104
    %1513 = vmatprep.subr.bf16.mxu0 %v1113
    %1514 = vmatpush1.bf16.msra.mxu0 %v1112
    %1515 = vmatprep.subr.bf16.mxu0 %v1121
    %1516 = vmatpush1.bf16.msra.mxu0 %v1120
    %1517 = vmatprep.subr.bf16.mxu0 %v1129
    %1518 = vmatpush1.bf16.msra.mxu0 %v1128
    %1519 = vmatprep.subr.bf16.mxu0 %v1137
    %1520 = vmatpush1.bf16.msra.mxu0 %v1136
    %1521 = vmatprep.subr.bf16.mxu0 %v1145
    %1522 = vmatpush1.bf16.msra.mxu0 %v1144
    %1523 = vmatprep.subr.bf16.mxu0 %v1153
    %1524 = vmatpush1.bf16.msra.mxu0 %v1152
    %1525 = vmatprep.subr.bf16.mxu0 %v1161
    %1526 = vmatpush1.bf16.msra.mxu0 %v1160
    %1527 = vmatprep.subr.bf16.mxu0 %v1169
    %1528 = vmatpush1.bf16.msra.mxu0 %v1168
    %1529 = vmatprep.subr.bf16.mxu0 %v1177
    %1530 = vmatpush1.bf16.msra.mxu0 %v1176
    %1531 = vmatprep.subr.bf16.mxu0 %v1185
    %1532 = vmatpush1.bf16.msra.mxu0 %v1184
    %1533 = vmatprep.subr.bf16.mxu0 %v1193
    %1534 = vmatpush1.bf16.msra.mxu0 %v1192
    %1535 = vmatprep.subr.bf16.mxu0 %v1201
    %1536 = vmatpush1.bf16.msra.mxu0 %v1200
    %1537 = vmatprep.subr.bf16.mxu0 %v1209
    %1538 = vmatpush1.bf16.msra.mxu0 %v1208
    %1539 = vmatprep.subr.bf16.mxu0 %v1217
    %1540 = vmatpush1.bf16.msra.mxu0 %v1216
    %1541 = vmatprep.mubr.bf16.mxu0 %v1221
    %1542 = vmatmul.mubr.bf16.gmra.mrb[0].mxu0 %v1220
    %v1543 = vpop.f32.mrb[0].mxu0
    %v1544 = vadd.f32 %v1503, %v1543
    %v1545 = vpop.f32.mrb[0].mxu0
    %v1546 = vadd.f32 %v1505, %v1545
    %v1547 = vpop.f32.mrb[0].mxu0
    %v1548 = vpop.f32.mrb[0].mxu0
    %1549 = vdwg.mxu0
    %v1550 = vrot.slane %v1298, 4
    %v1551 = vadd.f32 %v1298, %v1550
    %v1552 = vrot.slane %v1551, 2
    %v1553 = vadd.f32 %v1551, %v1552
    %v1554 = vrot.slane %v1553, 1
    %v1555 = vadd.f32 %v1553, %v1554
    %v1556 = vrot.slane %v1300, 4
    %v1557 = vadd.f32 %v1300, %v1556
    %v1558 = vrot.slane %v1557, 2
    %v1559 = vadd.f32 %v1557, %v1558
    %v1560 = vrot.slane %v1559, 1
    %v1561 = vadd.f32 %v1559, %v1560
    %v1562 = vrot.slane %v1380, 4
    %v1563 = vadd.f32 %v1380, %v1562
    %v1564 = vrot.slane %v1563, 2
    %v1565 = vadd.f32 %v1563, %v1564
    %v1566 = vrot.slane %v1565, 1
    %v1567 = vadd.f32 %v1565, %v1566
    %v1568 = vrot.slane %v1382, 4
    %v1569 = vadd.f32 %v1382, %v1568
    %v1570 = vrot.slane %v1569, 2
    %v1571 = vadd.f32 %v1569, %v1570
    %v1572 = vrot.slane %v1571, 1
    %v1573 = vadd.f32 %v1571, %v1572
    %v1574 = vrot.slane %v1462, 4
    %v1575 = vadd.f32 %v1462, %v1574
    %v1576 = vrot.slane %v1575, 2
    %v1577 = vadd.f32 %v1575, %v1576
    %v1578 = vrot.slane %v1577, 1
    %v1579 = vadd.f32 %v1577, %v1578
    %v1580 = vrot.slane %v1464, 4
    %v1581 = vadd.f32 %v1464, %v1580
    %v1582 = vrot.slane %v1581, 2
    %v1583 = vadd.f32 %v1581, %v1582
    %v1584 = vrot.slane %v1583, 1
    %v1585 = vadd.f32 %v1583, %v1584
    %v1586 = vrot.slane %v1544, 4
    %v1587 = vadd.f32 %v1544, %v1586
    %v1588 = vrot.slane %v1587, 2
    %v1589 = vadd.f32 %v1587, %v1588
    %v1590 = vrot.slane %v1589, 1
    %v1591 = vadd.f32 %v1589, %v1590
    %v1592 = vrot.slane %v1546, 4
    %v1593 = vadd.f32 %v1546, %v1592
    %v1594 = vrot.slane %v1593, 2
    %v1595 = vadd.f32 %v1593, %v1594
    %v1596 = vrot.slane %v1595, 1
    %v1597 = vadd.f32 %v1595, %v1596
    %v1598 = vmul.f32 %v1555, %v369
    %v1599 = vmul.f32 %v1561, %v369
    %v1600 = vmul.f32 %v1567, %v369
    %v1601 = vmul.f32 %v1573, %v369
    %v1602 = vmul.f32 %v1579, %v369
    %v1603 = vmul.f32 %v1585, %v369
    %v1604 = vmul.f32 %v1591, %v369
    %v1605 = vmul.f32 %v1597, %v369
    %v1606 = vsub.f32 %v1298, %v1598
    %v1607 = vsub.f32 %v1300, %v1599
    %v1608 = vsub.f32 %v1380, %v1600
    %v1609 = vsub.f32 %v1382, %v1601
    %v1610 = vsub.f32 %v1462, %v1602
    %v1611 = vsub.f32 %v1464, %v1603
    %v1612 = vsub.f32 %v1544, %v1604
    %v1613 = vsub.f32 %v1546, %v1605
    %v1614 = vmul.f32 %v1606, %v1606
    %v1615 = vmul.f32 %v1607, %v1607
    %v1616 = vmul.f32 %v1608, %v1608
    %v1617 = vmul.f32 %v1609, %v1609
    %v1618 = vmul.f32 %v1610, %v1610
    %v1619 = vmul.f32 %v1611, %v1611
    %v1620 = vmul.f32 %v1612, %v1612
    %v1621 = vmul.f32 %v1613, %v1613
    %v1622 = vrot.slane %v1614, 4
    %v1623 = vadd.f32 %v1614, %v1622
    %v1624 = vrot.slane %v1623, 2
    %v1625 = vadd.f32 %v1623, %v1624
    %v1626 = vrot.slane %v1625, 1
    %v1627 = vadd.f32 %v1625, %v1626
    %v1628 = vrot.slane %v1615, 4
    %v1629 = vadd.f32 %v1615, %v1628
    %v1630 = vrot.slane %v1629, 2
    %v1631 = vadd.f32 %v1629, %v1630
    %v1632 = vrot.slane %v1631, 1
    %v1633 = vadd.f32 %v1631, %v1632
    %v1634 = vrot.slane %v1616, 4
    %v1635 = vadd.f32 %v1616, %v1634
    %v1636 = vrot.slane %v1635, 2
    %v1637 = vadd.f32 %v1635, %v1636
    %v1638 = vrot.slane %v1637, 1
    %v1639 = vadd.f32 %v1637, %v1638
    %v1640 = vrot.slane %v1617, 4
    %v1641 = vadd.f32 %v1617, %v1640
    %v1642 = vrot.slane %v1641, 2
    %v1643 = vadd.f32 %v1641, %v1642
    %v1644 = vrot.slane %v1643, 1
    %v1645 = vadd.f32 %v1643, %v1644
    %v1646 = vrot.slane %v1618, 4
    %v1647 = vadd.f32 %v1618, %v1646
    %v1648 = vrot.slane %v1647, 2
    %v1649 = vadd.f32 %v1647, %v1648
    %v1650 = vrot.slane %v1649, 1
    %v1651 = vadd.f32 %v1649, %v1650
    %v1652 = vrot.slane %v1619, 4
    %v1653 = vadd.f32 %v1619, %v1652
    %v1654 = vrot.slane %v1653, 2
    %v1655 = vadd.f32 %v1653, %v1654
    %v1656 = vrot.slane %v1655, 1
    %v1657 = vadd.f32 %v1655, %v1656
    %v1658 = vrot.slane %v1620, 4
    %v1659 = vadd.f32 %v1620, %v1658
    %v1660 = vrot.slane %v1659, 2
    %v1661 = vadd.f32 %v1659, %v1660
    %v1662 = vrot.slane %v1661, 1
    %v1663 = vadd.f32 %v1661, %v1662
    %v1664 = vrot.slane %v1621, 4
    %v1665 = vadd.f32 %v1621, %v1664
    %v1666 = vrot.slane %v1665, 2
    %v1667 = vadd.f32 %v1665, %v1666
    %v1668 = vrot.slane %v1667, 1
    %v1669 = vadd.f32 %v1667, %v1668
    %v1670 = vmul.f32 %v1627, %v369
    %v1671 = vmul.f32 %v1633, %v369
    %v1672 = vmul.f32 %v1639, %v369
    %v1673 = vmul.f32 %v1645, %v369
    %v1674 = vmul.f32 %v1651, %v369
    %v1675 = vmul.f32 %v1657, %v369
    %v1676 = vmul.f32 %v1663, %v369
    %v1677 = vmul.f32 %v1669, %v369
    %v1678 = vadd.f32 %v1670, 0.8
    %v1679 = vadd.f32 %v1671, 0.8
    %v1680 = vadd.f32 %v1672, 0.8
    %v1681 = vadd.f32 %v1673, 0.8
    %v1682 = vadd.f32 %v1674, 0.8
    %v1683 = vadd.f32 %v1675, 0.8
    %v1684 = vadd.f32 %v1676, 0.8
    %v1685 = vadd.f32 %v1677, 0.8
    %v1686 = vrsqrt.pop %v1678
    %v1687 = vrsqrt.pop %v1679
    %v1688 = vrsqrt.pop %v1680
    %v1689 = vrsqrt.pop %v1681
    %v1690 = vrsqrt.pop %v1682
    %v1691 = vrsqrt.pop %v1683
    %v1692 = vrsqrt.pop %v1684
    %v1693 = vrsqrt.pop %v1685
    %v1694 = vmul.f32 %v1606, %v1686
    %v1695 = vmul.f32 %v1607, %v1687
    %v1696 = vmul.f32 %v1608, %v1688
    %v1697 = vmul.f32 %v1609, %v1689
    %v1698 = vmul.f32 %v1610, %v1690
    %v1699 = vmul.f32 %v1611, %v1691
    %v1700 = vmul.f32 %v1612, %v1692
    %v1701 = vmul.f32 %v1613, %v1693
    %vm1702 = vcmp.gt.f32.partialorder %v1694, 0.0
    %vm1703 = vcmp.gt.f32.partialorder %v1695, 0.0
    %vm1704 = vcmp.gt.f32.partialorder %v1696, 0.0
    %vm1705 = vcmp.gt.f32.partialorder %v1697, 0.0
    %vm1706 = vcmp.gt.f32.partialorder %v1698, 0.0
    %vm1707 = vcmp.gt.f32.partialorder %v1699, 0.0
    %vm1708 = vcmp.gt.f32.partialorder %v1700, 0.0
    %vm1709 = vcmp.gt.f32.partialorder %v1701, 0.0
    %v1710 = vmul.f32 %v1694, 0.2
    %v1711 = vmul.f32 %v1695, 0.2
    %v1712 = vmul.f32 %v1696, 0.2
    %v1713 = vmul.f32 %v1697, 0.2
    %v1714 = vmul.f32 %v1698, 0.2
    %v1715 = vmul.f32 %v1699, 0.2
    %v1716 = vmul.f32 %v1700, 0.2
    %v1717 = vmul.f32 %v1701, 0.2
    %v1718 = vsel %vm1702, %v1694, %v1710
    %v1719 = vsel %vm1703, %v1695, %v1711
    %v1720 = vsel %vm1704, %v1696, %v1712
    %v1721 = vsel %vm1705, %v1697, %v1713
    %v1722 = vsel %vm1706, %v1698, %v1714
    %v1723 = vsel %vm1707, %v1699, %v1715
    %v1724 = vsel %vm1708, %v1700, %v1716
    %v1725 = vsel %vm1709, %v1701, %v1717
    %s1726 = smul.u32 4, 128
    %s1727 = smul.u32 %s1726, 2
    %s1728 = sshll.u32 %s1727, 4
    %1729 = dma.done %s111, %s1728
    %v1730 = vld [vmem:[#allocation3] sm:$0xff]
    %v1731 = vld [vmem:[#allocation3 + $0x8] sm:$0xff]
    %v1732 = vld [vmem:[#allocation3 + $0x10] sm:$0xff]
    %v1733 = vld [vmem:[#allocation3 + $0x18] sm:$0xff]
    %v1734 = vld [vmem:[#allocation3 + $0x20] sm:$0xff]
    %v1735 = vld [vmem:[#allocation3 + $0x28] sm:$0xff]
    %v1736 = vld [vmem:[#allocation3 + $0x30] sm:$0xff]
    %v1737 = vld [vmem:[#allocation3 + $0x38] sm:$0xff]
    %v1738 = vld [vmem:[#allocation3 + $0x40] sm:$0xff]
    %v1739 = vld [vmem:[#allocation3 + $0x48] sm:$0xff]
    %v1740 = vld [vmem:[#allocation3 + $0x50] sm:$0xff]
    %v1741 = vld [vmem:[#allocation3 + $0x58] sm:$0xff]
    %v1742 = vld [vmem:[#allocation3 + $0x60] sm:$0xff]
    %v1743 = vld [vmem:[#allocation3 + $0x68] sm:$0xff]
    %v1744 = vld [vmem:[#allocation3 + $0x70] sm:$0xff]
    %v1745 = vld [vmem:[#allocation3 + $0x78] sm:$0xff]
    %v1746 = vld [vmem:[#allocation3 + $0x80] sm:$0xff]
    %v1747 = vld [vmem:[#allocation3 + $0x88] sm:$0xff]
    %v1748 = vld [vmem:[#allocation3 + $0x90] sm:$0xff]
    %v1749 = vld [vmem:[#allocation3 + $0x98] sm:$0xff]
    %v1750 = vld [vmem:[#allocation3 + $0xa0] sm:$0xff]
    %v1751 = vld [vmem:[#allocation3 + $0xa8] sm:$0xff]
    %v1752 = vld [vmem:[#allocation3 + $0xb0] sm:$0xff]
    %v1753 = vld [vmem:[#allocation3 + $0xb8] sm:$0xff]
    %v1754 = vld [vmem:[#allocation3 + $0xc0] sm:$0xff]
    %v1755 = vld [vmem:[#allocation3 + $0xc8] sm:$0xff]
    %v1756 = vld [vmem:[#allocation3 + $0xd0] sm:$0xff]
    %v1757 = vld [vmem:[#allocation3 + $0xd8] sm:$0xff]
    %v1758 = vld [vmem:[#allocation3 + $0xe0] sm:$0xff]
    %v1759 = vld [vmem:[#allocation3 + $0xe8] sm:$0xff]
    %v1760 = vld [vmem:[#allocation3 + $0xf0] sm:$0xff]
    %v1761 = vld [vmem:[#allocation3 + $0xf8] sm:$0xff]
    %v1762 = vld [vmem:[#allocation3 + $0x100] sm:$0xff]
    %v1763 = vld [vmem:[#allocation3 + $0x108] sm:$0xff]
    %v1764 = vld [vmem:[#allocation3 + $0x110] sm:$0xff]
    %v1765 = vld [vmem:[#allocation3 + $0x118] sm:$0xff]
    %v1766 = vld [vmem:[#allocation3 + $0x120] sm:$0xff]
    %v1767 = vld [vmem:[#allocation3 + $0x128] sm:$0xff]
    %v1768 = vld [vmem:[#allocation3 + $0x130] sm:$0xff]
    %v1769 = vld [vmem:[#allocation3 + $0x138] sm:$0xff]
    %v1770 = vld [vmem:[#allocation3 + $0x140] sm:$0xff]
    %v1771 = vld [vmem:[#allocation3 + $0x148] sm:$0xff]
    %v1772 = vld [vmem:[#allocation3 + $0x150] sm:$0xff]
    %v1773 = vld [vmem:[#allocation3 + $0x158] sm:$0xff]
    %v1774 = vld [vmem:[#allocation3 + $0x160] sm:$0xff]
    %v1775 = vld [vmem:[#allocation3 + $0x168] sm:$0xff]
    %v1776 = vld [vmem:[#allocation3 + $0x170] sm:$0xff]
    %v1777 = vld [vmem:[#allocation3 + $0x178] sm:$0xff]
    %v1778 = vld [vmem:[#allocation3 + $0x180] sm:$0xff]
    %v1779 = vld [vmem:[#allocation3 + $0x188] sm:$0xff]
    %v1780 = vld [vmem:[#allocation3 + $0x190] sm:$0xff]
    %v1781 = vld [vmem:[#allocation3 + $0x198] sm:$0xff]
    %v1782 = vld [vmem:[#allocation3 + $0x1a0] sm:$0xff]
    %v1783 = vld [vmem:[#allocation3 + $0x1a8] sm:$0xff]
    %v1784 = vld [vmem:[#allocation3 + $0x1b0] sm:$0xff]
    %v1785 = vld [vmem:[#allocation3 + $0x1b8] sm:$0xff]
    %v1786 = vld [vmem:[#allocation3 + $0x1c0] sm:$0xff]
    %v1787 = vld [vmem:[#allocation3 + $0x1c8] sm:$0xff]
    %v1788 = vld [vmem:[#allocation3 + $0x1d0] sm:$0xff]
    %v1789 = vld [vmem:[#allocation3 + $0x1d8] sm:$0xff]
    %v1790 = vld [vmem:[#allocation3 + $0x1e0] sm:$0xff]
    %v1791 = vld [vmem:[#allocation3 + $0x1e8] sm:$0xff]
    %v1792 = vld [vmem:[#allocation3 + $0x1f0] sm:$0xff]
    %v1793 = vld [vmem:[#allocation3 + $0x1f8] sm:$0xff]
    %v1794 = vld [vmem:[#allocation3 + $0x200] sm:$0xff]
    %v1795 = vld [vmem:[#allocation3 + $0x208] sm:$0xff]
    %v1796 = vld [vmem:[#allocation3 + $0x210] sm:$0xff]
    %v1797 = vld [vmem:[#allocation3 + $0x218] sm:$0xff]
    %v1798 = vld [vmem:[#allocation3 + $0x220] sm:$0xff]
    %v1799 = vld [vmem:[#allocation3 + $0x228] sm:$0xff]
    %v1800 = vld [vmem:[#allocation3 + $0x230] sm:$0xff]
    %v1801 = vld [vmem:[#allocation3 + $0x238] sm:$0xff]
    %v1802 = vld [vmem:[#allocation3 + $0x240] sm:$0xff]
    %v1803 = vld [vmem:[#allocation3 + $0x248] sm:$0xff]
    %v1804 = vld [vmem:[#allocation3 + $0x250] sm:$0xff]
    %v1805 = vld [vmem:[#allocation3 + $0x258] sm:$0xff]
    %v1806 = vld [vmem:[#allocation3 + $0x260] sm:$0xff]
    %v1807 = vld [vmem:[#allocation3 + $0x268] sm:$0xff]
    %v1808 = vld [vmem:[#allocation3 + $0x270] sm:$0xff]
    %v1809 = vld [vmem:[#allocation3 + $0x278] sm:$0xff]
    %v1810 = vld [vmem:[#allocation3 + $0x280] sm:$0xff]
    %v1811 = vld [vmem:[#allocation3 + $0x288] sm:$0xff]
    %v1812 = vld [vmem:[#allocation3 + $0x290] sm:$0xff]
    %v1813 = vld [vmem:[#allocation3 + $0x298] sm:$0xff]
    %v1814 = vld [vmem:[#allocation3 + $0x2a0] sm:$0xff]
    %v1815 = vld [vmem:[#allocation3 + $0x2a8] sm:$0xff]
    %v1816 = vld [vmem:[#allocation3 + $0x2b0] sm:$0xff]
    %v1817 = vld [vmem:[#allocation3 + $0x2b8] sm:$0xff]
    %v1818 = vld [vmem:[#allocation3 + $0x2c0] sm:$0xff]
    %v1819 = vld [vmem:[#allocation3 + $0x2c8] sm:$0xff]
    %v1820 = vld [vmem:[#allocation3 + $0x2d0] sm:$0xff]
    %v1821 = vld [vmem:[#allocation3 + $0x2d8] sm:$0xff]
    %v1822 = vld [vmem:[#allocation3 + $0x2e0] sm:$0xff]
    %v1823 = vld [vmem:[#allocation3 + $0x2e8] sm:$0xff]
    %v1824 = vld [vmem:[#allocation3 + $0x2f0] sm:$0xff]
    %v1825 = vld [vmem:[#allocation3 + $0x2f8] sm:$0xff]
    %v1826 = vld [vmem:[#allocation3 + $0x300] sm:$0xff]
    %v1827 = vld [vmem:[#allocation3 + $0x308] sm:$0xff]
    %v1828 = vld [vmem:[#allocation3 + $0x310] sm:$0xff]
    %v1829 = vld [vmem:[#allocation3 + $0x318] sm:$0xff]
    %v1830 = vld [vmem:[#allocation3 + $0x320] sm:$0xff]
    %v1831 = vld [vmem:[#allocation3 + $0x328] sm:$0xff]
    %v1832 = vld [vmem:[#allocation3 + $0x330] sm:$0xff]
    %v1833 = vld [vmem:[#allocation3 + $0x338] sm:$0xff]
    %v1834 = vld [vmem:[#allocation3 + $0x340] sm:$0xff]
    %v1835 = vld [vmem:[#allocation3 + $0x348] sm:$0xff]
    %v1836 = vld [vmem:[#allocation3 + $0x350] sm:$0xff]
    %v1837 = vld [vmem:[#allocation3 + $0x358] sm:$0xff]
    %v1838 = vld [vmem:[#allocation3 + $0x360] sm:$0xff]
    %v1839 = vld [vmem:[#allocation3 + $0x368] sm:$0xff]
    %v1840 = vld [vmem:[#allocation3 + $0x370] sm:$0xff]
    %v1841 = vld [vmem:[#allocation3 + $0x378] sm:$0xff]
    %v1842 = vld [vmem:[#allocation3 + $0x380] sm:$0xff]
    %v1843 = vld [vmem:[#allocation3 + $0x388] sm:$0xff]
    %v1844 = vld [vmem:[#allocation3 + $0x390] sm:$0xff]
    %v1845 = vld [vmem:[#allocation3 + $0x398] sm:$0xff]
    %v1846 = vld [vmem:[#allocation3 + $0x3a0] sm:$0xff]
    %v1847 = vld [vmem:[#allocation3 + $0x3a8] sm:$0xff]
    %v1848 = vld [vmem:[#allocation3 + $0x3b0] sm:$0xff]
    %v1849 = vld [vmem:[#allocation3 + $0x3b8] sm:$0xff]
    %v1850 = vld [vmem:[#allocation3 + $0x3c0] sm:$0xff]
    %v1851 = vld [vmem:[#allocation3 + $0x3c8] sm:$0xff]
    %v1852 = vld [vmem:[#allocation3 + $0x3d0] sm:$0xff]
    %v1853 = vld [vmem:[#allocation3 + $0x3d8] sm:$0xff]
    %v1854 = vld [vmem:[#allocation3 + $0x3e0] sm:$0xff]
    %v1855 = vld [vmem:[#allocation3 + $0x3e8] sm:$0xff]
    %v1856 = vld [vmem:[#allocation3 + $0x3f0] sm:$0xff]
    %v1857 = vld [vmem:[#allocation3 + $0x3f8] sm:$0xff]
    %v1858 = vpack.c.bf16 %v1718, %v1718
    %v1859 = vpack.c.bf16 %v1719, %v1719
    %v1860 = vpack.c.bf16 %v1720, %v1720
    %v1861 = vpack.c.bf16 %v1721, %v1721
    %v1862 = vpack.c.bf16 %v1722, %v1722
    %v1863 = vpack.c.bf16 %v1723, %v1723
    %v1864 = vpack.c.bf16 %v1724, %v1724
    %v1865 = vpack.c.bf16 %v1725, %v1725
    %v1867 = vlaneseq
    %v1868 = vshrl.u32 %v1867, 7
    %v1869 = vsub.s32 0, %v1868
    %v1870 = vrot.slane %v147, %v1869
    %v1871 = vlaneseq
    %v1872 = vshrl.u32 %v1871, 7
    %v1873 = vsub.s32 1, %v1872
    %v1874 = vrot.slane %v147, %v1873
    %1877 = vmatprep.subr.bf16.mxu0 %v1731
    %1878 = vmatpush1.bf16.msra.mxu0 %v1730
    %1879 = vmatprep.subr.bf16.mxu0 %v1733
    %1880 = vmatpush1.bf16.msra.mxu0 %v1732
    %1881 = vmatprep.subr.bf16.mxu0 %v1735
    %1882 = vmatpush1.bf16.msra.mxu0 %v1734
    %1883 = vmatprep.subr.bf16.mxu0 %v1737
    %1884 = vmatpush1.bf16.msra.mxu0 %v1736
    %1885 = vmatprep.subr.bf16.mxu0 %v1739
    %1886 = vmatpush1.bf16.msra.mxu0 %v1738
    %1887 = vmatprep.subr.bf16.mxu0 %v1741
    %1888 = vmatpush1.bf16.msra.mxu0 %v1740
    %1889 = vmatprep.subr.bf16.mxu0 %v1743
    %1890 = vmatpush1.bf16.msra.mxu0 %v1742
    %1891 = vmatprep.subr.bf16.mxu0 %v1745
    %1892 = vmatpush1.bf16.msra.mxu0 %v1744
    %1893 = vmatprep.subr.bf16.mxu0 %v1747
    %1894 = vmatpush1.bf16.msra.mxu0 %v1746
    %1895 = vmatprep.subr.bf16.mxu0 %v1749
    %1896 = vmatpush1.bf16.msra.mxu0 %v1748
    %1897 = vmatprep.subr.bf16.mxu0 %v1751
    %1898 = vmatpush1.bf16.msra.mxu0 %v1750
    %1899 = vmatprep.subr.bf16.mxu0 %v1753
    %1900 = vmatpush1.bf16.msra.mxu0 %v1752
    %1901 = vmatprep.subr.bf16.mxu0 %v1755
    %1902 = vmatpush1.bf16.msra.mxu0 %v1754
    %1903 = vmatprep.subr.bf16.mxu0 %v1757
    %1904 = vmatpush1.bf16.msra.mxu0 %v1756
    %1905 = vmatprep.subr.bf16.mxu0 %v1759
    %1906 = vmatpush1.bf16.msra.mxu0 %v1758
    %1907 = vmatprep.subr.bf16.mxu0 %v1761
    %1908 = vmatpush1.bf16.msra.mxu0 %v1760
    %1909 = vmatprep.mubr.bf16.mxu0 %v1859
    %1910 = vmatmul.mubr.bf16.gmra.mrb[0].mxu0 %v1858
    %v1911 = vpop.f32.mrb[0].mxu0
    %v1912 = vadd.f32 %v1870, %v1911
    %v1913 = vpop.f32.mrb[0].mxu0
    %v1914 = vadd.f32 %v1874, %v1913
    %v1915 = vpop.f32.mrb[0].mxu0
    %v1916 = vpop.f32.mrb[0].mxu0
    %1917 = vdwg.mxu0
    %1918 = vmatprep.subr.bf16.mxu0 %v1763
    %1919 = vmatpush1.bf16.msra.mxu0 %v1762
    %1920 = vmatprep.subr.bf16.mxu0 %v1765
    %1921 = vmatpush1.bf16.msra.mxu0 %v1764
    %1922 = vmatprep.subr.bf16.mxu0 %v1767
    %1923 = vmatpush1.bf16.msra.mxu0 %v1766
    %1924 = vmatprep.subr.bf16.mxu0 %v1769
    %1925 = vmatpush1.bf16.msra.mxu0 %v1768
    %1926 = vmatprep.subr.bf16.mxu0 %v1771
    %1927 = vmatpush1.bf16.msra.mxu0 %v1770
    %1928 = vmatprep.subr.bf16.mxu0 %v1773
    %1929 = vmatpush1.bf16.msra.mxu0 %v1772
    %1930 = vmatprep.subr.bf16.mxu0 %v1775
    %1931 = vmatpush1.bf16.msra.mxu0 %v1774
    %1932 = vmatprep.subr.bf16.mxu0 %v1777
    %1933 = vmatpush1.bf16.msra.mxu0 %v1776
    %1934 = vmatprep.subr.bf16.mxu0 %v1779
    %1935 = vmatpush1.bf16.msra.mxu0 %v1778
    %1936 = vmatprep.subr.bf16.mxu0 %v1781
    %1937 = vmatpush1.bf16.msra.mxu0 %v1780
    %1938 = vmatprep.subr.bf16.mxu0 %v1783
    %1939 = vmatpush1.bf16.msra.mxu0 %v1782
    %1940 = vmatprep.subr.bf16.mxu0 %v1785
    %1941 = vmatpush1.bf16.msra.mxu0 %v1784
    %1942 = vmatprep.subr.bf16.mxu0 %v1787
    %1943 = vmatpush1.bf16.msra.mxu0 %v1786
    %1944 = vmatprep.subr.bf16.mxu0 %v1789
    %1945 = vmatpush1.bf16.msra.mxu0 %v1788
    %1946 = vmatprep.subr.bf16.mxu0 %v1791
    %1947 = vmatpush1.bf16.msra.mxu0 %v1790
    %1948 = vmatprep.subr.bf16.mxu0 %v1793
    %1949 = vmatpush1.bf16.msra.mxu0 %v1792
    %1950 = vmatprep.mubr.bf16.mxu0 %v1861
    %1951 = vmatmul.mubr.bf16.gmra.mrb[0].mxu0 %v1860
    %v1952 = vpop.f32.mrb[0].mxu0
    %v1953 = vadd.f32 %v1912, %v1952
    %v1954 = vpop.f32.mrb[0].mxu0
    %v1955 = vadd.f32 %v1914, %v1954
    %v1956 = vpop.f32.mrb[0].mxu0
    %v1957 = vpop.f32.mrb[0].mxu0
    %1958 = vdwg.mxu0
    %1959 = vmatprep.subr.bf16.mxu0 %v1795
    %1960 = vmatpush1.bf16.msra.mxu0 %v1794
    %1961 = vmatprep.subr.bf16.mxu0 %v1797
    %1962 = vmatpush1.bf16.msra.mxu0 %v1796
    %1963 = vmatprep.subr.bf16.mxu0 %v1799
    %1964 = vmatpush1.bf16.msra.mxu0 %v1798
    %1965 = vmatprep.subr.bf16.mxu0 %v1801
    %1966 = vmatpush1.bf16.msra.mxu0 %v1800
    %1967 = vmatprep.subr.bf16.mxu0 %v1803
    %1968 = vmatpush1.bf16.msra.mxu0 %v1802
    %1969 = vmatprep.subr.bf16.mxu0 %v1805
    %1970 = vmatpush1.bf16.msra.mxu0 %v1804
    %1971 = vmatprep.subr.bf16.mxu0 %v1807
    %1972 = vmatpush1.bf16.msra.mxu0 %v1806
    %1973 = vmatprep.subr.bf16.mxu0 %v1809
    %1974 = vmatpush1.bf16.msra.mxu0 %v1808
    %1975 = vmatprep.subr.bf16.mxu0 %v1811
    %1976 = vmatpush1.bf16.msra.mxu0 %v1810
    %1977 = vmatprep.subr.bf16.mxu0 %v1813
    %1978 = vmatpush1.bf16.msra.mxu0 %v1812
    %1979 = vmatprep.subr.bf16.mxu0 %v1815
    %1980 = vmatpush1.bf16.msra.mxu0 %v1814
    %1981 = vmatprep.subr.bf16.mxu0 %v1817
    %1982 = vmatpush1.bf16.msra.mxu0 %v1816
    %1983 = vmatprep.subr.bf16.mxu0 %v1819
    %1984 = vmatpush1.bf16.msra.mxu0 %v1818
    %1985 = vmatprep.subr.bf16.mxu0 %v1821
    %1986 = vmatpush1.bf16.msra.mxu0 %v1820
    %1987 = vmatprep.subr.bf16.mxu0 %v1823
    %1988 = vmatpush1.bf16.msra.mxu0 %v1822
    %1989 = vmatprep.subr.bf16.mxu0 %v1825
    %1990 = vmatpush1.bf16.msra.mxu0 %v1824
    %1991 = vmatprep.mubr.bf16.mxu0 %v1863
    %1992 = vmatmul.mubr.bf16.gmra.mrb[0].mxu0 %v1862
    %v1993 = vpop.f32.mrb[0].mxu0
    %v1994 = vadd.f32 %v1953, %v1993
    %v1995 = vpop.f32.mrb[0].mxu0
    %v1996 = vadd.f32 %v1955, %v1995
    %v1997 = vpop.f32.mrb[0].mxu0
    %v1998 = vpop.f32.mrb[0].mxu0
    %1999 = vdwg.mxu0
    %2000 = vmatprep.subr.bf16.mxu0 %v1827
    %2001 = vmatpush1.bf16.msra.mxu0 %v1826
    %2002 = vmatprep.subr.bf16.mxu0 %v1829
    %2003 = vmatpush1.bf16.msra.mxu0 %v1828
    %2004 = vmatprep.subr.bf16.mxu0 %v1831
    %2005 = vmatpush1.bf16.msra.mxu0 %v1830
    %2006 = vmatprep.subr.bf16.mxu0 %v1833
    %2007 = vmatpush1.bf16.msra.mxu0 %v1832
    %2008 = vmatprep.subr.bf16.mxu0 %v1835
    %2009 = vmatpush1.bf16.msra.mxu0 %v1834
    %2010 = vmatprep.subr.bf16.mxu0 %v1837
    %2011 = vmatpush1.bf16.msra.mxu0 %v1836
    %2012 = vmatprep.subr.bf16.mxu0 %v1839
    %2013 = vmatpush1.bf16.msra.mxu0 %v1838
    %2014 = vmatprep.subr.bf16.mxu0 %v1841
    %2015 = vmatpush1.bf16.msra.mxu0 %v1840
    %2016 = vmatprep.subr.bf16.mxu0 %v1843
    %2017 = vmatpush1.bf16.msra.mxu0 %v1842
    %2018 = vmatprep.subr.bf16.mxu0 %v1845
    %2019 = vmatpush1.bf16.msra.mxu0 %v1844
    %2020 = vmatprep.subr.bf16.mxu0 %v1847
    %2021 = vmatpush1.bf16.msra.mxu0 %v1846
    %2022 = vmatprep.subr.bf16.mxu0 %v1849
    %2023 = vmatpush1.bf16.msra.mxu0 %v1848
    %2024 = vmatprep.subr.bf16.mxu0 %v1851
    %2025 = vmatpush1.bf16.msra.mxu0 %v1850
    %2026 = vmatprep.subr.bf16.mxu0 %v1853
    %2027 = vmatpush1.bf16.msra.mxu0 %v1852
    %2028 = vmatprep.subr.bf16.mxu0 %v1855
    %2029 = vmatpush1.bf16.msra.mxu0 %v1854
    %2030 = vmatprep.subr.bf16.mxu0 %v1857
    %2031 = vmatpush1.bf16.msra.mxu0 %v1856
    %2032 = vmatprep.mubr.bf16.mxu0 %v1865
    %2033 = vmatmul.mubr.bf16.gmra.mrb[0].mxu0 %v1864
    %v2034 = vpop.f32.mrb[0].mxu0
    %v2035 = vadd.f32 %v1994, %v2034
    %v2036 = vpop.f32.mrb[0].mxu0
    %v2037 = vadd.f32 %v1996, %v2036
    %v2038 = vpop.f32.mrb[0].mxu0
    %v2039 = vpop.f32.mrb[0].mxu0
    %2040 = vdwg.mxu0
    %v2041 = vtanh.pop %v2035
    %v2042 = vtanh.pop %v2037
    %2043 = vst [vmem:[%s7] sm:$0xff] %v2041
    %2044 = vst [vmem:[%s7 + $0x8] sm:$0xff] %v2042
    // Predicated region
    $region38: #{generator_apply.1} parent=1 // pred_check
      _
    $region39: #{generator_apply.1} parent=1 // pred_check_branch
      %2046 = sbr.rel (0) target = $region41
    $region40: #{generator_apply.1} parent=1 // pred_region
      _
    $region41: #{generator_apply.1} parent=1 // pred_fallthru
      _
    // Predicated region
    $region42: #{generator_apply.1} parent=1 // pred_check
      _
    $region43: #{generator_apply.1} parent=1 // pred_check_branch
      %2048 = sbr.rel (0) target = $region45
    $region44: #{generator_apply.1} parent=1 // pred_region
      _
    $region45: #{generator_apply.1} parent=1 // pred_fallthru
      _
    %2049 = vsyncpa [#allocation6], 1
    %2050 = vsyncpa [#allocation8], 1
    %2051 = vsyncpa [#allocation11], 1
  %2052 = vsyncmov [#allocation4]
  %s2053 = vpop.sfrf %2052
  %p2054 = scmp.eq.s32.totalorder %s2053, 0
  %p2055 = pneg %p2054
  %2057 = shalt.err (%p2055)
  %s2058 = scalar_lea.sflag [#allocation4], 1
  %2059 = vsyncmov %s2058
  %s2060 = vpop.sfrf %2059
  %p2061 = scmp.eq.s32.totalorder %s2060, 0
  %p2062 = pneg %p2061
  %2064 = shalt.err (%p2062)

</llo_original>
